<compile_context>
chip_gen: v6e
topology: v6e:2x2x1
jax: 0.10.0
libtpu: 0.0.40
codegen_flags: <defaults>
</compile_context>

<pallas_src>
import functools

import jax
import jax.numpy as jnp
from jax.experimental import pallas as pl
from jax.experimental.pallas import tpu as pltpu


_PALLAS_MIN_BYTES = 256 * 1024  # below this, let XLA fuse the plain-jnp path


# ---------------------------------------------------------------------------
# Small helpers
# ---------------------------------------------------------------------------
def _cdiv(a, b):
    return -(-a // b)


def _round_up(a, b):
    return _cdiv(a, b) * b


def _sublane_pack(dtype):
    # 8 for f32, 16 for bf16, 32 for int8/fp8 (packed sublane tile).
    return max(8, 32 // jnp.dtype(dtype).itemsize)


def _mish_f32(z):
    # mish(z) = z * tanh(softplus(z)).  With t = exp(z):
    #   tanh(log1p(t)) = ((1+t)^2 - 1)/((1+t)^2 + 1) = t(t+2) / (t(t+2) + 2)
    # PyTorch softplus(threshold=20) returns z for z > 20 and tanh(z>20) == 1
    # in f32, so mish(z) == z on that branch; clamping exp's argument keeps
    # the unselected branch finite.  Exact divide (kernel is HBM-bound).
    t = jnp.exp(jnp.minimum(z, 20.0))
    u = t * (t + 2.0)
    return jnp.where(z > 20.0, z, z * (u / (u + 2.0)))


def _mish_ref(x):
    # Literal torch formulation: x * tanh(softplus(x)), threshold=20.
    xf = x.astype(jnp.float32)
    sp = jnp.where(xf > 20.0, xf, jnp.log1p(jnp.exp(jnp.minimum(xf, 20.0))))
    return (xf * jnp.tanh(sp)).astype(x.dtype)


# ---------------------------------------------------------------------------
# Fused bias + Mish (+ residual) Pallas kernel
# ---------------------------------------------------------------------------
def _bias_mish_kernel(x_ref, b_ref, o_ref):
    z = x_ref[...].astype(jnp.float32) + b_ref[...].astype(jnp.float32)[None, :, :]
    o_ref[...] = _mish_f32(z).astype(o_ref.dtype)


def _bias_mish_res_kernel(x_ref, b_ref, r_ref, o_ref):
    z = x_ref[...].astype(jnp.float32) + b_ref[...].astype(jnp.float32)[None, :, :]
    y = _mish_f32(z) + r_ref[...].astype(jnp.float32)
    o_ref[...] = y.astype(o_ref.dtype)


def _fused_jnp(x, bias, residual=None):
    # Same math as the kernel; small tensors stay here so XLA fuses it into
    # the conv/pool fusions instead of paying a pallas_call round trip.
    y = _mish_f32(x.astype(jnp.float32) + bias.astype(jnp.float32)[None, :, None])
    if residual is not None:
        y = y + residual.astype(jnp.float32)
    return y.astype(x.dtype)


def bias_mish(x, bias, residual=None, *, force_pallas=False, block_bytes=1 << 20):
    """Fused  mish(x + bias[None, :, None]) (+ residual)  for x of shape (N, C, L)."""
    n_batch, n_chan, length = x.shape
    itemsize = jnp.dtype(x.dtype).itemsize

    if not force_pallas and x.size * itemsize < _PALLAS_MIN_BYTES:
        return _fused_jnp(x, bias, residual)

    # Channel tile targeting ~block_bytes of x per grid step, rounded to the
    # dtype's sublane pack.  Ragged last blocks are handled by Pallas.
    pack = _sublane_pack(x.dtype)
    tile_c = max(block_bytes // max(length * itemsize, 1), pack)
    tile_c = _round_up(int(tile_c), pack)
    if tile_c >= n_chan:
        tile_c = n_chan
        # v7x megacore: avoid a single-step grid when there is only one batch
        # row — split the channel axis so both TensorCores get work.
        if n_batch == 1 and n_chan > 2 * pack:
            tile_c = min(n_chan, _round_up(_cdiv(n_chan, 2), pack))
    grid = (n_batch, _cdiv(n_chan, tile_c))

    x_spec = pl.BlockSpec((1, tile_c, length), lambda n, c: (n, c, 0))
    b_spec = pl.BlockSpec((tile_c, 1), lambda n, c: (c, 0))
    bias2d = jnp.reshape(bias, (n_chan, 1))

    if residual is None:
        kernel = _bias_mish_kernel
        in_specs = [x_spec, b_spec]
        operands = (x, bias2d)
        n_streams = 2        # read x + write out
    else:
        kernel = _bias_mish_res_kernel
        in_specs = [x_spec, b_spec, x_spec]
        operands = (x, bias2d, residual)
        n_streams = 3        # read x + read residual + write out

    n = x.size
    cost = pl.CostEstimate(
        flops=8 * n,
        transcendentals=n,
        bytes_accessed=n_streams * n * itemsize + n_chan * itemsize,
    )

    return pl.pallas_call(
        kernel,
        out_shape=jax.ShapeDtypeStruct(x.shape, x.dtype),
        grid_spec=pltpu.PrefetchScalarGridSpec(
            num_scalar_prefetch=0,
            grid=grid,
            in_specs=in_specs,
            out_specs=x_spec,
        ),
        compiler_params=pltpu.CompilerParams(
            dimension_semantics=("parallel", "parallel"),
        ),
        cost_estimate=cost,
    )(*operands)


# ---------------------------------------------------------------------------
# Model building blocks (conv / BN / pool / linear via jax.lax)
# ---------------------------------------------------------------------------
def _conv1d(x, w, stride, padding):
    # x: (N, C, L), w: (O, I, K)
    return jax.lax.conv_general_dilated(
        x, w,
        window_strides=(stride,),
        padding=[(padding, padding)],
        dimension_numbers=("NCH", "OIH", "NCH"),
    )


def _batchnorm1d(x, bn, eps=1e-5):
    gamma, beta, mean, var = bn
    inv = gamma * jax.lax.rsqrt(var + eps)
    return x * inv[None, :, None] + (beta - mean * inv)[None, :, None]


def _fold_bn(w, bn, eps=1e-5):
    # Eval-mode BN folded into the (bias-free) conv weights + per-channel bias.
    gamma, beta, mean, var = bn
    scale = gamma * jax.lax.rsqrt(var + eps)
    return w * scale[:, None, None], beta - mean * scale


def _maxpool1d(x, kernel, stride, padding):
    return jax.lax.reduce_window(
        x, jnp.array(-jnp.inf, dtype=x.dtype), jax.lax.max,
        window_dimensions=(1, 1, kernel),
        window_strides=(1, 1, stride),
        padding=[(0, 0), (0, 0), (padding, padding)],
    )


# ---------------------------------------------------------------------------
# base_Model forward
# ---------------------------------------------------------------------------
def base_model_forward(params, x_in, *, kernel_size, stride, force_pallas=False):
    """Optimized forward: BN folded into convs, fused bias+Mish(+residual)."""
    pad = kernel_size // 2
    act = functools.partial(bias_mish, force_pallas=force_pallas)

    # conv_block1
    w, b = _fold_bn(params["conv1_w"], params["bn1"])
    x = act(_conv1d(x_in, w, stride, pad), b)
    x = _maxpool1d(x, 2, 2, 1)
    # TODO(synk): nn.Dropout is identity in eval mode; training-mode dropout not implemented.

    # conv_block2 (+ residual)
    w, b = _fold_bn(params["conv2_w"], params["bn2"])
    x = act(_conv1d(x, w, 1, pad), b, residual=x)

    # conv_block3
    w, b = _fold_bn(params["conv3_w"], params["bn3"])
    x = _maxpool1d(act(_conv1d(x, w, 1, pad), b), 2, 2, 1)

    # conv_block4 (+ residual)
    w, b = _fold_bn(params["conv4_w"], params["bn4"])
    x = act(_conv1d(x, w, 1, pad), b, residual=x)

    # conv_block5
    w, b = _fold_bn(params["conv5_w"], params["bn5"])
    x = _maxpool1d(act(_conv1d(x, w, 1, pad), b), 2, stride, 1)

    x_flat = x.reshape(x.shape[0], -1)
    logits = x_flat @ params["logits_w"].T + params["logits_b"]
    return logits, x


def base_model_forward_ref(params, x_in, *, kernel_size, stride):
    """Pure-JAX reference mirroring the PyTorch module op-for-op."""
    pad = kernel_size // 2

    x = _mish_ref(_batchnorm1d(_conv1d(x_in, params["conv1_w"], stride, pad), params["bn1"]))
    x = _maxpool1d(x, 2, 2, 1)

    h = _mish_ref(_batchnorm1d(_conv1d(x, params["conv2_w"], 1, pad), params["bn2"]))
    x = h + x

    h = _mish_ref(_batchnorm1d(_conv1d(x, params["conv3_w"], 1, pad), params["bn3"]))
    x = _maxpool1d(h, 2, 2, 1)

    h = _mish_ref(_batchnorm1d(_conv1d(x, params["conv4_w"], 1, pad), params["bn4"]))
    x = h + x

    h = _mish_ref(_batchnorm1d(_conv1d(x, params["conv5_w"], 1, pad), params["bn5"]))
    x = _maxpool1d(h, 2, stride, 1)

    x_flat = x.reshape(x.shape[0], -1)
    logits = x_flat @ params["logits_w"].T + params["logits_b"]
    return logits, x


# ---------------------------------------------------------------------------
# Parameter init helpers
# ---------------------------------------------------------------------------
def _conv_init(key, out_c, in_c, k):
    scale = 1.0 / jnp.sqrt(jnp.asarray(in_c * k, jnp.float32))
    return scale * jax.random.normal(key, (out_c, in_c, k), dtype=jnp.float32)


def _bn_init(key, c):
    kg, kb = jax.random.split(key)
    gamma = 1.0 + 0.1 * jax.random.normal(kg, (c,), dtype=jnp.float32)
    beta = 0.1 * jax.random.normal(kb, (c,), dtype=jnp.float32)
    mean = jnp.zeros((c,), jnp.float32)   # eval-mode running stats (fresh model)
    var = jnp.ones((c,), jnp.float32)
    return (gamma, beta, mean, var)


def _len_after(length, k, s, p):
    return (length + 2 * p - k) // s + 1


if __name__ == "__main__":
    key = jax.random.PRNGKey(0)

    # configs implied by base_Model (small test sizes)
    BATCH = 2
    IN_CH = 4          # configs.input_channels
    SEQ_LEN = 16       # input sequence length
    K = 3              # configs.kernel_size (odd, so residual lengths match)
    STRIDE = 1         # configs.stride
    FINAL_CH = 32      # configs.final_out_channels
    NUM_CLASSES = 5    # configs.num_classes

    # features_len implied by the conv/pool stack
    L = _len_after(SEQ_LEN, K, STRIDE, K // 2)   # conv_block1 conv
    L = _len_after(L, 2, 2, 1)                   # conv_block1 pool
    L = _len_after(L, 2, 2, 1)                   # conv_block3 pool
    L = _len_after(L, 2, STRIDE, 1)              # conv_block5 pool
    FEATURES_LEN = L

    keys = jax.random.split(key, 16)
    params = {
        "conv1_w": _conv_init(keys[0], 64, IN_CH, K),
        "bn1": _bn_init(keys[1], 64),
        "conv2_w": _conv_init(keys[2], 64, 64, K),
        "bn2": _bn_init(keys[3], 64),
        "conv3_w": _conv_init(keys[4], 128, 64, K),
        "bn3": _bn_init(keys[5], 128),
        "conv4_w": _conv_init(keys[6], 128, 128, K),
        "bn4": _bn_init(keys[7], 128),
        "conv5_w": _conv_init(keys[8], FINAL_CH, 128, K),
        "bn5": _bn_init(keys[9], FINAL_CH),
        "logits_w": 0.05 * jax.random.normal(
            keys[10], (NUM_CLASSES, FEATURES_LEN * FINAL_CH), dtype=jnp.float32),
        "logits_b": jnp.zeros((NUM_CLASSES,), jnp.float32),
    }

    x_in = jax.random.normal(keys[11], (BATCH, IN_CH, SEQ_LEN), dtype=jnp.float32)

    fwd_pallas = jax.jit(functools.partial(
        base_model_forward, kernel_size=K, stride=STRIDE, force_pallas=True))
    fwd_auto = jax.jit(functools.partial(
        base_model_forward, kernel_size=K, stride=STRIDE, force_pallas=False))
    fwd_ref = jax.jit(functools.partial(
        base_model_forward_ref, kernel_size=K, stride=STRIDE))

    logits_p, feats_p = fwd_pallas(params, x_in)
    jax.block_until_ready((logits_p, feats_p))
    logits_a, feats_a = fwd_auto(params, x_in)
    jax.block_until_ready((logits_a, feats_a))
    logits_r, feats_r = fwd_ref(params, x_in)
    jax.block_until_ready((logits_r, feats_r))

    assert logits_p.shape == (BATCH, NUM_CLASSES)
    assert feats_p.shape == (BATCH, FINAL_CH, FEATURES_LEN)
    for lg, ft in ((logits_p, feats_p), (logits_a, feats_a)):
        assert jnp.allclose(lg, logits_r, atol=1e-3, rtol=1e-3)
        assert jnp.allclose(ft, feats_r, atol=1e-3, rtol=1e-3)

    # --- standalone fused-kernel checks ------------------------------------
    # 1) large activation + bias + residual (multi-step grid, Pallas path).
    xa = 3.0 * jax.random.normal(keys[12], (4, 192, 256), dtype=jnp.float32)
    ba = 0.5 * jax.random.normal(keys[13], (192,), dtype=jnp.float32)
    ra = jax.random.normal(keys[14], (4, 192, 256), dtype=jnp.float32)
    ya = bias_mish(xa, ba, residual=ra, force_pallas=True)
    jax.block_until_ready(ya)
    ya_ref = _mish_ref(xa + ba[None, :, None]) + ra
    assert ya.shape == xa.shape and ya.dtype == xa.dtype
    assert jnp.allclose(ya, ya_ref, atol=1e-3, rtol=1e-3)

    # 2) ragged channel tiling (C=100 with 32-channel blocks, no pad/slice
    #    copies) and the softplus threshold=20 fast path.
    xb = jnp.linspace(-30.0, 30.0, 2 * 100 * 160, dtype=jnp.float32).reshape(2, 100, 160)
    yb = bias_mish(xb, jnp.zeros((100,), jnp.float32), force_pallas=True,
                   block_bytes=32 * 160 * 4)
    jax.block_until_ready(yb)
    assert jnp.allclose(yb, _mish_ref(xb), atol=1e-3, rtol=1e-3)

    print("KERNEL_OK")
</pallas_src>

<mosaic_0001>
module attributes {stable_mosaic.version = 11 : i64} {
  func.func @_bias_mish_kernel(%arg0: i32, %arg1: i32, %arg2: memref<1x64x16xf32, #tpu.memory_space<vmem>>, %arg3: memref<64x1xf32, #tpu.memory_space<vmem>>, %arg4: memref<1x64x16xf32, #tpu.memory_space<vmem>>) attributes {dimension_semantics = [#tpu.dimension_semantics<parallel>, #tpu.dimension_semantics<parallel>], iteration_bounds = array<i64: 2, 1>, scalar_prefetch = 0 : i64, scratch_operands = 0 : i64, tpu.core_type = #tpu.core_type<tc>, window_params = [{transform_indices = @transform_0, window_bounds = array<i64: 1, 64, 16>}, {transform_indices = @transform_1, window_bounds = array<i64: 64, 1>}, {transform_indices = @transform_2, window_bounds = array<i64: 1, 64, 16>}]} {
    %c0 = arith.constant 0 : index
    %c0_0 = arith.constant 0 : index
    %c0_1 = arith.constant 0 : index
    %0 = vector.load %arg2[%c0, %c0_0, %c0_1] : memref<1x64x16xf32, #tpu.memory_space<vmem>>, vector<1x64x16xf32>
    %c0_2 = arith.constant 0 : index
    %c0_3 = arith.constant 0 : index
    %1 = vector.load %arg3[%c0_2, %c0_3] : memref<64x1xf32, #tpu.memory_space<vmem>>, vector<64x1xf32>
    %2 = vector.shape_cast %1 : vector<64x1xf32> to vector<1x64x1xf32>
    %3 = vector.broadcast %2 : vector<1x64x1xf32> to vector<1x64x16xf32>
    %4 = arith.addf %0, %3 : vector<1x64x16xf32>
    %cst = arith.constant 2.000000e+01 : f32
    %5 = vector.broadcast %cst : f32 to vector<1x64x16xf32>
    %6 = arith.minimumf %4, %5 : vector<1x64x16xf32>
    %7 = math.exp %6 : vector<1x64x16xf32>
    %cst_4 = arith.constant 2.000000e+00 : f32
    %8 = vector.broadcast %cst_4 : f32 to vector<1x64x16xf32>
    %9 = arith.addf %7, %8 : vector<1x64x16xf32>
    %10 = arith.mulf %7, %9 : vector<1x64x16xf32>
    %cst_5 = arith.constant 2.000000e+01 : f32
    %11 = vector.broadcast %cst_5 : f32 to vector<1x64x16xf32>
    %12 = arith.cmpf ogt, %4, %11 : vector<1x64x16xf32>
    %cst_6 = arith.constant 2.000000e+00 : f32
    %13 = vector.broadcast %cst_6 : f32 to vector<1x64x16xf32>
    %14 = arith.addf %10, %13 : vector<1x64x16xf32>
    %15 = arith.divf %10, %14 : vector<1x64x16xf32>
    %16 = arith.mulf %4, %15 : vector<1x64x16xf32>
    %17 = arith.select %12, %4, %16 : vector<1x64x16xi1>, vector<1x64x16xf32>
    %c0_7 = arith.constant 0 : index
    %c0_8 = arith.constant 0 : index
    %c0_9 = arith.constant 0 : index
    %18 = vector.load %arg4[%c0_7, %c0_8, %c0_9] : memref<1x64x16xf32, #tpu.memory_space<vmem>>, vector<1x64x16xf32>
    tpu.vector_store %arg4[%c0_7, %c0_8, %c0_9], %17 {strides = array<i32>} : memref<1x64x16xf32, #tpu.memory_space<vmem>>, vector<1x64x16xf32>,
    return
  }
  func.func @transform_0(%arg0: i32, %arg1: i32) -> (i32, i32, i32) {
    %c0_i32 = arith.constant 0 : i32
    %c0_i32_0 = arith.constant 0 : i32
    return %arg0, %arg1, %c0_i32 : i32, i32, i32
  }
  func.func @transform_1(%arg0: i32, %arg1: i32) -> (i32, i32) {
    %c0_i32 = arith.constant 0 : i32
    %c0_i32_0 = arith.constant 0 : i32
    return %arg1, %c0_i32 : i32, i32
  }
  func.func @transform_2(%arg0: i32, %arg1: i32) -> (i32, i32, i32) {
    %c0_i32 = arith.constant 0 : i32
    %c0_i32_0 = arith.constant 0 : i32
    return %arg0, %arg1, %c0_i32 : i32, i32, i32
  }
}

module attributes {stable_mosaic.version = 11 : i64} {
  func.func @_bias_mish_res_kernel(%arg0: i32, %arg1: i32, %arg2: memref<1x64x9xf32, #tpu.memory_space<vmem>>, %arg3: memref<64x1xf32, #tpu.memory_space<vmem>>, %arg4: memref<1x64x9xf32, #tpu.memory_space<vmem>>, %arg5: memref<1x64x9xf32, #tpu.memory_space<vmem>>) attributes {dimension_semantics = [#tpu.dimension_semantics<parallel>, #tpu.dimension_semantics<parallel>], iteration_bounds = array<i64: 2, 1>, scalar_prefetch = 0 : i64, scratch_operands = 0 : i64, tpu.core_type = #tpu.core_type<tc>, window_params = [{transform_indices = @transform_0, window_bounds = array<i64: 1, 64, 9>}, {transform_indices = @transform_1, window_bounds = array<i64: 64, 1>}, {transform_indices = @transform_2, window_bounds = array<i64: 1, 64, 9>}, {transform_indices = @transform_3, window_bounds = array<i64: 1, 64, 9>}]} {
    %c0 = arith.constant 0 : index
    %c0_0 = arith.constant 0 : index
    %c0_1 = arith.constant 0 : index
    %0 = vector.load %arg2[%c0, %c0_0, %c0_1] : memref<1x64x9xf32, #tpu.memory_space<vmem>>, vector<1x64x9xf32>
    %c0_2 = arith.constant 0 : index
    %c0_3 = arith.constant 0 : index
    %1 = vector.load %arg3[%c0_2, %c0_3] : memref<64x1xf32, #tpu.memory_space<vmem>>, vector<64x1xf32>
    %2 = vector.shape_cast %1 : vector<64x1xf32> to vector<1x64x1xf32>
    %3 = vector.broadcast %2 : vector<1x64x1xf32> to vector<1x64x9xf32>
    %4 = arith.addf %0, %3 : vector<1x64x9xf32>
    %cst = arith.constant 2.000000e+01 : f32
    %5 = vector.broadcast %cst : f32 to vector<1x64x9xf32>
    %6 = arith.minimumf %4, %5 : vector<1x64x9xf32>
    %7 = math.exp %6 : vector<1x64x9xf32>
    %cst_4 = arith.constant 2.000000e+00 : f32
    %8 = vector.broadcast %cst_4 : f32 to vector<1x64x9xf32>
    %9 = arith.addf %7, %8 : vector<1x64x9xf32>
    %10 = arith.mulf %7, %9 : vector<1x64x9xf32>
    %cst_5 = arith.constant 2.000000e+01 : f32
    %11 = vector.broadcast %cst_5 : f32 to vector<1x64x9xf32>
    %12 = arith.cmpf ogt, %4, %11 : vector<1x64x9xf32>
    %cst_6 = arith.constant 2.000000e+00 : f32
    %13 = vector.broadcast %cst_6 : f32 to vector<1x64x9xf32>
    %14 = arith.addf %10, %13 : vector<1x64x9xf32>
    %15 = arith.divf %10, %14 : vector<1x64x9xf32>
    %16 = arith.mulf %4, %15 : vector<1x64x9xf32>
    %17 = arith.select %12, %4, %16 : vector<1x64x9xi1>, vector<1x64x9xf32>
    %c0_7 = arith.constant 0 : index
    %c0_8 = arith.constant 0 : index
    %c0_9 = arith.constant 0 : index
    %18 = vector.load %arg4[%c0_7, %c0_8, %c0_9] : memref<1x64x9xf32, #tpu.memory_space<vmem>>, vector<1x64x9xf32>
    %19 = arith.addf %17, %18 : vector<1x64x9xf32>
    %c0_10 = arith.constant 0 : index
    %c0_11 = arith.constant 0 : index
    %c0_12 = arith.constant 0 : index
    %20 = vector.load %arg5[%c0_10, %c0_11, %c0_12] : memref<1x64x9xf32, #tpu.memory_space<vmem>>, vector<1x64x9xf32>
    tpu.vector_store %arg5[%c0_10, %c0_11, %c0_12], %19 {strides = array<i32>} : memref<1x64x9xf32, #tpu.memory_space<vmem>>, vector<1x64x9xf32>,
    return
  }
  func.func @transform_0(%arg0: i32, %arg1: i32) -> (i32, i32, i32) {
    %c0_i32 = arith.constant 0 : i32
    %c0_i32_0 = arith.constant 0 : i32
    return %arg0, %arg1, %c0_i32 : i32, i32, i32
  }
  func.func @transform_1(%arg0: i32, %arg1: i32) -> (i32, i32) {
    %c0_i32 = arith.constant 0 : i32
    %c0_i32_0 = arith.constant 0 : i32
    return %arg1, %c0_i32 : i32, i32
  }
  func.func @transform_2(%arg0: i32, %arg1: i32) -> (i32, i32, i32) {
    %c0_i32 = arith.constant 0 : i32
    %c0_i32_0 = arith.constant 0 : i32
    return %arg0, %arg1, %c0_i32 : i32, i32, i32
  }
  func.func @transform_3(%arg0: i32, %arg1: i32) -> (i32, i32, i32) {
    %c0_i32 = arith.constant 0 : i32
    %c0_i32_0 = arith.constant 0 : i32
    return %arg0, %arg1, %c0_i32 : i32, i32, i32
  }
}

module attributes {stable_mosaic.version = 11 : i64} {
  func.func @_bias_mish_kernel(%arg0: i32, %arg1: i32, %arg2: memref<1x128x9xf32, #tpu.memory_space<vmem>>, %arg3: memref<128x1xf32, #tpu.memory_space<vmem>>, %arg4: memref<1x128x9xf32, #tpu.memory_space<vmem>>) attributes {dimension_semantics = [#tpu.dimension_semantics<parallel>, #tpu.dimension_semantics<parallel>], iteration_bounds = array<i64: 2, 1>, scalar_prefetch = 0 : i64, scratch_operands = 0 : i64, tpu.core_type = #tpu.core_type<tc>, window_params = [{transform_indices = @transform_0, window_bounds = array<i64: 1, 128, 9>}, {transform_indices = @transform_1, window_bounds = array<i64: 128, 1>}, {transform_indices = @transform_2, window_bounds = array<i64: 1, 128, 9>}]} {
    %c0 = arith.constant 0 : index
    %c0_0 = arith.constant 0 : index
    %c0_1 = arith.constant 0 : index
    %0 = vector.load %arg2[%c0, %c0_0, %c0_1] : memref<1x128x9xf32, #tpu.memory_space<vmem>>, vector<1x128x9xf32>
    %c0_2 = arith.constant 0 : index
    %c0_3 = arith.constant 0 : index
    %1 = vector.load %arg3[%c0_2, %c0_3] : memref<128x1xf32, #tpu.memory_space<vmem>>, vector<128x1xf32>
    %2 = vector.shape_cast %1 : vector<128x1xf32> to vector<1x128x1xf32>
    %3 = vector.broadcast %2 : vector<1x128x1xf32> to vector<1x128x9xf32>
    %4 = arith.addf %0, %3 : vector<1x128x9xf32>
    %cst = arith.constant 2.000000e+01 : f32
    %5 = vector.broadcast %cst : f32 to vector<1x128x9xf32>
    %6 = arith.minimumf %4, %5 : vector<1x128x9xf32>
    %7 = math.exp %6 : vector<1x128x9xf32>
    %cst_4 = arith.constant 2.000000e+00 : f32
    %8 = vector.broadcast %cst_4 : f32 to vector<1x128x9xf32>
    %9 = arith.addf %7, %8 : vector<1x128x9xf32>
    %10 = arith.mulf %7, %9 : vector<1x128x9xf32>
    %cst_5 = arith.constant 2.000000e+01 : f32
    %11 = vector.broadcast %cst_5 : f32 to vector<1x128x9xf32>
    %12 = arith.cmpf ogt, %4, %11 : vector<1x128x9xf32>
    %cst_6 = arith.constant 2.000000e+00 : f32
    %13 = vector.broadcast %cst_6 : f32 to vector<1x128x9xf32>
    %14 = arith.addf %10, %13 : vector<1x128x9xf32>
    %15 = arith.divf %10, %14 : vector<1x128x9xf32>
    %16 = arith.mulf %4, %15 : vector<1x128x9xf32>
    %17 = arith.select %12, %4, %16 : vector<1x128x9xi1>, vector<1x128x9xf32>
    %c0_7 = arith.constant 0 : index
    %c0_8 = arith.constant 0 : index
    %c0_9 = arith.constant 0 : index
    %18 = vector.load %arg4[%c0_7, %c0_8, %c0_9] : memref<1x128x9xf32, #tpu.memory_space<vmem>>, vector<1x128x9xf32>
    tpu.vector_store %arg4[%c0_7, %c0_8, %c0_9], %17 {strides = array<i32>} : memref<1x128x9xf32, #tpu.memory_space<vmem>>, vector<1x128x9xf32>,
    return
  }
  func.func @transform_0(%arg0: i32, %arg1: i32) -> (i32, i32, i32) {
    %c0_i32 = arith.constant 0 : i32
    %c0_i32_0 = arith.constant 0 : i32
    return %arg0, %arg1, %c0_i32 : i32, i32, i32
  }
  func.func @transform_1(%arg0: i32, %arg1: i32) -> (i32, i32) {
    %c0_i32 = arith.constant 0 : i32
    %c0_i32_0 = arith.constant 0 : i32
    return %arg1, %c0_i32 : i32, i32
  }
  func.func @transform_2(%arg0: i32, %arg1: i32) -> (i32, i32, i32) {
    %c0_i32 = arith.constant 0 : i32
    %c0_i32_0 = arith.constant 0 : i32
    return %arg0, %arg1, %c0_i32 : i32, i32, i32
  }
}

module attributes {stable_mosaic.version = 11 : i64} {
  func.func @_bias_mish_res_kernel(%arg0: i32, %arg1: i32, %arg2: memref<1x128x5xf32, #tpu.memory_space<vmem>>, %arg3: memref<128x1xf32, #tpu.memory_space<vmem>>, %arg4: memref<1x128x5xf32, #tpu.memory_space<vmem>>, %arg5: memref<1x128x5xf32, #tpu.memory_space<vmem>>) attributes {dimension_semantics = [#tpu.dimension_semantics<parallel>, #tpu.dimension_semantics<parallel>], iteration_bounds = array<i64: 2, 1>, scalar_prefetch = 0 : i64, scratch_operands = 0 : i64, tpu.core_type = #tpu.core_type<tc>, window_params = [{transform_indices = @transform_0, window_bounds = array<i64: 1, 128, 5>}, {transform_indices = @transform_1, window_bounds = array<i64: 128, 1>}, {transform_indices = @transform_2, window_bounds = array<i64: 1, 128, 5>}, {transform_indices = @transform_3, window_bounds = array<i64: 1, 128, 5>}]} {
    %c0 = arith.constant 0 : index
    %c0_0 = arith.constant 0 : index
    %c0_1 = arith.constant 0 : index
    %0 = vector.load %arg2[%c0, %c0_0, %c0_1] : memref<1x128x5xf32, #tpu.memory_space<vmem>>, vector<1x128x5xf32>
    %c0_2 = arith.constant 0 : index
    %c0_3 = arith.constant 0 : index
    %1 = vector.load %arg3[%c0_2, %c0_3] : memref<128x1xf32, #tpu.memory_space<vmem>>, vector<128x1xf32>
    %2 = vector.shape_cast %1 : vector<128x1xf32> to vector<1x128x1xf32>
    %3 = vector.broadcast %2 : vector<1x128x1xf32> to vector<1x128x5xf32>
    %4 = arith.addf %0, %3 : vector<1x128x5xf32>
    %cst = arith.constant 2.000000e+01 : f32
    %5 = vector.broadcast %cst : f32 to vector<1x128x5xf32>
    %6 = arith.minimumf %4, %5 : vector<1x128x5xf32>
    %7 = math.exp %6 : vector<1x128x5xf32>
    %cst_4 = arith.constant 2.000000e+00 : f32
    %8 = vector.broadcast %cst_4 : f32 to vector<1x128x5xf32>
    %9 = arith.addf %7, %8 : vector<1x128x5xf32>
    %10 = arith.mulf %7, %9 : vector<1x128x5xf32>
    %cst_5 = arith.constant 2.000000e+01 : f32
    %11 = vector.broadcast %cst_5 : f32 to vector<1x128x5xf32>
    %12 = arith.cmpf ogt, %4, %11 : vector<1x128x5xf32>
    %cst_6 = arith.constant 2.000000e+00 : f32
    %13 = vector.broadcast %cst_6 : f32 to vector<1x128x5xf32>
    %14 = arith.addf %10, %13 : vector<1x128x5xf32>
    %15 = arith.divf %10, %14 : vector<1x128x5xf32>
    %16 = arith.mulf %4, %15 : vector<1x128x5xf32>
    %17 = arith.select %12, %4, %16 : vector<1x128x5xi1>, vector<1x128x5xf32>
    %c0_7 = arith.constant 0 : index
    %c0_8 = arith.constant 0 : index
    %c0_9 = arith.constant 0 : index
    %18 = vector.load %arg4[%c0_7, %c0_8, %c0_9] : memref<1x128x5xf32, #tpu.memory_space<vmem>>, vector<1x128x5xf32>
    %19 = arith.addf %17, %18 : vector<1x128x5xf32>
    %c0_10 = arith.constant 0 : index
    %c0_11 = arith.constant 0 : index
    %c0_12 = arith.constant 0 : index
    %20 = vector.load %arg5[%c0_10, %c0_11, %c0_12] : memref<1x128x5xf32, #tpu.memory_space<vmem>>, vector<1x128x5xf32>
    tpu.vector_store %arg5[%c0_10, %c0_11, %c0_12], %19 {strides = array<i32>} : memref<1x128x5xf32, #tpu.memory_space<vmem>>, vector<1x128x5xf32>,
    return
  }
  func.func @transform_0(%arg0: i32, %arg1: i32) -> (i32, i32, i32) {
    %c0_i32 = arith.constant 0 : i32
    %c0_i32_0 = arith.constant 0 : i32
    return %arg0, %arg1, %c0_i32 : i32, i32, i32
  }
  func.func @transform_1(%arg0: i32, %arg1: i32) -> (i32, i32) {
    %c0_i32 = arith.constant 0 : i32
    %c0_i32_0 = arith.constant 0 : i32
    return %arg1, %c0_i32 : i32, i32
  }
  func.func @transform_2(%arg0: i32, %arg1: i32) -> (i32, i32, i32) {
    %c0_i32 = arith.constant 0 : i32
    %c0_i32_0 = arith.constant 0 : i32
    return %arg0, %arg1, %c0_i32 : i32, i32, i32
  }
  func.func @transform_3(%arg0: i32, %arg1: i32) -> (i32, i32, i32) {
    %c0_i32 = arith.constant 0 : i32
    %c0_i32_0 = arith.constant 0 : i32
    return %arg0, %arg1, %c0_i32 : i32, i32, i32
  }
}

module attributes {stable_mosaic.version = 11 : i64} {
  func.func @_bias_mish_kernel(%arg0: i32, %arg1: i32, %arg2: memref<1x32x5xf32, #tpu.memory_space<vmem>>, %arg3: memref<32x1xf32, #tpu.memory_space<vmem>>, %arg4: memref<1x32x5xf32, #tpu.memory_space<vmem>>) attributes {dimension_semantics = [#tpu.dimension_semantics<parallel>, #tpu.dimension_semantics<parallel>], iteration_bounds = array<i64: 2, 1>, scalar_prefetch = 0 : i64, scratch_operands = 0 : i64, tpu.core_type = #tpu.core_type<tc>, window_params = [{transform_indices = @transform_0, window_bounds = array<i64: 1, 32, 5>}, {transform_indices = @transform_1, window_bounds = array<i64: 32, 1>}, {transform_indices = @transform_2, window_bounds = array<i64: 1, 32, 5>}]} {
    %c0 = arith.constant 0 : index
    %c0_0 = arith.constant 0 : index
    %c0_1 = arith.constant 0 : index
    %0 = vector.load %arg2[%c0, %c0_0, %c0_1] : memref<1x32x5xf32, #tpu.memory_space<vmem>>, vector<1x32x5xf32>
    %c0_2 = arith.constant 0 : index
    %c0_3 = arith.constant 0 : index
    %1 = vector.load %arg3[%c0_2, %c0_3] : memref<32x1xf32, #tpu.memory_space<vmem>>, vector<32x1xf32>
    %2 = vector.shape_cast %1 : vector<32x1xf32> to vector<1x32x1xf32>
    %3 = vector.broadcast %2 : vector<1x32x1xf32> to vector<1x32x5xf32>
    %4 = arith.addf %0, %3 : vector<1x32x5xf32>
    %cst = arith.constant 2.000000e+01 : f32
    %5 = vector.broadcast %cst : f32 to vector<1x32x5xf32>
    %6 = arith.minimumf %4, %5 : vector<1x32x5xf32>
    %7 = math.exp %6 : vector<1x32x5xf32>
    %cst_4 = arith.constant 2.000000e+00 : f32
    %8 = vector.broadcast %cst_4 : f32 to vector<1x32x5xf32>
    %9 = arith.addf %7, %8 : vector<1x32x5xf32>
    %10 = arith.mulf %7, %9 : vector<1x32x5xf32>
    %cst_5 = arith.constant 2.000000e+01 : f32
    %11 = vector.broadcast %cst_5 : f32 to vector<1x32x5xf32>
    %12 = arith.cmpf ogt, %4, %11 : vector<1x32x5xf32>
    %cst_6 = arith.constant 2.000000e+00 : f32
    %13 = vector.broadcast %cst_6 : f32 to vector<1x32x5xf32>
    %14 = arith.addf %10, %13 : vector<1x32x5xf32>
    %15 = arith.divf %10, %14 : vector<1x32x5xf32>
    %16 = arith.mulf %4, %15 : vector<1x32x5xf32>
    %17 = arith.select %12, %4, %16 : vector<1x32x5xi1>, vector<1x32x5xf32>
    %c0_7 = arith.constant 0 : index
    %c0_8 = arith.constant 0 : index
    %c0_9 = arith.constant 0 : index
    %18 = vector.load %arg4[%c0_7, %c0_8, %c0_9] : memref<1x32x5xf32, #tpu.memory_space<vmem>>, vector<1x32x5xf32>
    tpu.vector_store %arg4[%c0_7, %c0_8, %c0_9], %17 {strides = array<i32>} : memref<1x32x5xf32, #tpu.memory_space<vmem>>, vector<1x32x5xf32>,
    return
  }
  func.func @transform_0(%arg0: i32, %arg1: i32) -> (i32, i32, i32) {
    %c0_i32 = arith.constant 0 : i32
    %c0_i32_0 = arith.constant 0 : i32
    return %arg0, %arg1, %c0_i32 : i32, i32, i32
  }
  func.func @transform_1(%arg0: i32, %arg1: i32) -> (i32, i32) {
    %c0_i32 = arith.constant 0 : i32
    %c0_i32_0 = arith.constant 0 : i32
    return %arg1, %c0_i32 : i32, i32
  }
  func.func @transform_2(%arg0: i32, %arg1: i32) -> (i32, i32, i32) {
    %c0_i32 = arith.constant 0 : i32
    %c0_i32_0 = arith.constant 0 : i32
    return %arg0, %arg1, %c0_i32 : i32, i32, i32
  }
}

</mosaic_0001>

<llo_original>
// kernel: base_model_forward.6
$region0: #{base_model_forward.6}
  #allocation0 [shape = 'u32[]', space=smem, size = 0x4, offset = 0x4, fixed_abs, tag = 'smem constant byte address 0x4 - core index']
  #allocation1 [shape = 'u32[144,128]{1,0:T(1,128)}', space=vmem, size = 0x12000, scoped, tag = 'internal scratch']
  %s0 = inlined_call_operand.vmem [shape: f32[2,64,9], index: 0, kind: input, shape index: {}]
  %s1 = inlined_call_operand.vmem [shape: f32[64,1], index: 1, kind: input, shape index: {}]
  %s2 = inlined_call_operand.vmem [shape: f32[2,64,9], index: 2, kind: input, shape index: {}]
  %s3 = inlined_call_operand.vmem [shape: f32[2,64,9], index: 3, kind: output, shape index: {}]
  %s4 = sld [smem:[#allocation0]]
  $region45: #{base_model_forward.6} parent=0
    _
  %s6 = ssub.s32 1, %s4
  %s7 = scalar_select 0, %s6, %s4
  loop: start=0, step=1, limit=4
  $region2: #{base_model_forward.6} parent=0 // loop_pre_header
    _
  $region3: #{base_model_forward.6} parent=0 // loop_header
    %s9 = sphi 0, %s13
    %p10 = scmp.ge.s32.totalorder %s9, 4
    %s16 = sphi 0, %s28
    %s17 = sphi 0, %s24
    %s18 = sphi 0, %s16
    %s19 = sphi 0, %s17
    %s20 = sphi 0, %s18
    %s21 = sphi 0, %s19
    %s33 = sphi 0, %s35
    %s36 = sphi 0, %s33
    %s37 = sphi 0, %s36
    %s53 = sphi 0, %s37
    %s59 = sphi 0, %s61
    %s62 = sphi 0, %s59
    %s63 = sphi 0, %s62
    %s79 = sphi 0, %s63
    %s87 = sphi 0, %s89
    %s90 = sphi 0, %s87
    %s91 = sphi 0, %s90
    %s107 = sphi 0, %s91
    %s115 = sphi 0, %s117
    %s118 = sphi 0, %s115
    %s119 = sphi 0, %s118
    %s135 = sphi 0, %s119
  $region4: #{base_model_forward.6} parent=0 // loop_header_branch
    %12 = sbr.rel (%p10) target = $region8
  $region5: #{base_model_forward.6} parent=0 // loop_body
    %s14 = ssub.s32 %s9, 1
    %s15 = ssub.s32 %s9, 2
    %s22 = sadd.s32 1, %s17
    %p23 = scmp.ge.s32.totalorder %s22, 1
    %s24 = scalar_select %p23, 0, %s22
    %s25 = sadd.s32 1, %s16
    %s26 = scalar_select %p23, %s25, %s16
    %p27 = scmp.ge.s32.totalorder %s26, 2
    %s28 = scalar_select %p27, 0, %s26
    %s29 = ssub.s32 %s16, %s28
    %s30 = ssub.s32 %s17, %s24
    %s31 = sor.u32 %s29, %s30
    %p32 = scmp.eq.s32.totalorder %s31, 0
    %s34 = sadd.s32 %s33, 1
    %s35 = scalar_select %p32, %s33, %s34
    %p38 = pneg %p32
    %p39 = scmp.eq.s32.totalorder %s9, 1
    %p40 = por %p38, %p39
    %p41 = scmp.ne.s32.totalorder %s33, %s36
    %p42 = scmp.eq.s32.totalorder %s9, 0
    %p43 = por %p41, %p42
    %p44 = scmp.ne.s32.totalorder %s33, %s36
    %p45 = scmp.eq.s32.totalorder %s14, 1
    %p46 = por %p44, %p45
    %p47 = scmp.ne.s32.totalorder %s36, %s37
    %p48 = scmp.eq.s32.totalorder %s14, 0
    %p49 = por %p47, %p48
    %p50 = scmp.ne.s32.totalorder %s36, %s37
    %p51 = scmp.eq.s32.totalorder %s15, 1
    %p52 = por %p50, %p51
    %p54 = scmp.ne.s32.totalorder %s37, %s53
    %p55 = scmp.eq.s32.totalorder %s15, 0
    %p56 = por %p54, %p55
    %s57 = ssub.s32 %s17, %s24
    %p58 = scmp.eq.s32.totalorder %s57, 0
    %s60 = sadd.s32 %s59, 1
    %s61 = scalar_select %p58, %s59, %s60
    %p64 = pneg %p58
    %p65 = scmp.eq.s32.totalorder %s9, 1
    %p66 = por %p64, %p65
    %p67 = scmp.ne.s32.totalorder %s59, %s62
    %p68 = scmp.eq.s32.totalorder %s9, 0
    %p69 = por %p67, %p68
    %p70 = scmp.ne.s32.totalorder %s59, %s62
    %p71 = scmp.eq.s32.totalorder %s14, 1
    %p72 = por %p70, %p71
    %p73 = scmp.ne.s32.totalorder %s62, %s63
    %p74 = scmp.eq.s32.totalorder %s14, 0
    %p75 = por %p73, %p74
    %p76 = scmp.ne.s32.totalorder %s62, %s63
    %p77 = scmp.eq.s32.totalorder %s15, 1
    %p78 = por %p76, %p77
    %p80 = scmp.ne.s32.totalorder %s63, %s79
    %p81 = scmp.eq.s32.totalorder %s15, 0
    %p82 = por %p80, %p81
    %s83 = ssub.s32 %s16, %s28
    %s84 = ssub.s32 %s17, %s24
    %s85 = sor.u32 %s83, %s84
    %p86 = scmp.eq.s32.totalorder %s85, 0
    %s88 = sadd.s32 %s87, 1
    %s89 = scalar_select %p86, %s87, %s88
    %p92 = pneg %p86
    %p93 = scmp.eq.s32.totalorder %s9, 1
    %p94 = por %p92, %p93
    %p95 = scmp.ne.s32.totalorder %s87, %s90
    %p96 = scmp.eq.s32.totalorder %s9, 0
    %p97 = por %p95, %p96
    %p98 = scmp.ne.s32.totalorder %s87, %s90
    %p99 = scmp.eq.s32.totalorder %s14, 1
    %p100 = por %p98, %p99
    %p101 = scmp.ne.s32.totalorder %s90, %s91
    %p102 = scmp.eq.s32.totalorder %s14, 0
    %p103 = por %p101, %p102
    %p104 = scmp.ne.s32.totalorder %s90, %s91
    %p105 = scmp.eq.s32.totalorder %s15, 1
    %p106 = por %p104, %p105
    %p108 = scmp.ne.s32.totalorder %s91, %s107
    %p109 = scmp.eq.s32.totalorder %s15, 0
    %p110 = por %p108, %p109
    %s111 = ssub.s32 %s16, %s28
    %s112 = ssub.s32 %s17, %s24
    %s113 = sor.u32 %s111, %s112
    %p114 = scmp.eq.s32.totalorder %s113, 0
    %s116 = sadd.s32 %s115, 1
    %s117 = scalar_select %p114, %s115, %s116
    %p120 = pneg %p114
    %p121 = scmp.eq.s32.totalorder %s9, 1
    %p122 = por %p120, %p121
    %p123 = scmp.ne.s32.totalorder %s115, %s118
    %p124 = scmp.eq.s32.totalorder %s9, 0
    %p125 = por %p123, %p124
    %p126 = scmp.ne.s32.totalorder %s115, %s118
    %p127 = scmp.eq.s32.totalorder %s14, 1
    %p128 = por %p126, %p127
    %p129 = scmp.ne.s32.totalorder %s118, %s119
    %p130 = scmp.eq.s32.totalorder %s14, 0
    %p131 = por %p129, %p130
    %p132 = scmp.ne.s32.totalorder %s118, %s119
    %p133 = scmp.eq.s32.totalorder %s15, 1
    %p134 = por %p132, %p133
    %p136 = scmp.ne.s32.totalorder %s119, %s135
    %p137 = scmp.eq.s32.totalorder %s15, 0
    %p138 = por %p136, %p137
    %p139 = scmp.le.s32.totalorder 1, %s9
    %p140 = scmp.lt.s32.totalorder %s9, 3
    %p141 = pnand %p139, %p140
    %p142 = pneg %p141
    // Predicated region
    $region9: #{base_model_forward.6} parent=5 // pred_check
      _
    $region10: #{base_model_forward.6} parent=5 // pred_check_branch
      %144 = sbr.rel (%p141) target = $region12
    $region11: #{base_model_forward.6} parent=5 // pred_region
      %s145 = ssub.s32 %s9, 1
      // Predicated region
      $region13: #{base_model_forward.6} parent=11 // pred_check
        %p146 = pneg %p75
      $region14: #{base_model_forward.6} parent=11 // pred_check_branch
        %148 = sbr.rel (%p146) target = $region16
      $region15: #{base_model_forward.6} parent=11 // pred_region
        %s149 = smul.u32 8, %s19
        %p150 = scmp.lt.s32.totalorder %s149, 7
        %s151 = scalar_select %p150, %s149, 7
        %s152 = smul.addr %s151, 8
        %s153 = scalar_lea.vmem %s1, %s152
        %s154 = smul.u32 8, %s19
      $region16: #{base_model_forward.6} parent=11 // pred_fallthru
        _
    $region12: #{base_model_forward.6} parent=5 // pred_fallthru
      _
    %p155 = scmp.lt.s32.totalorder %s9, 2
    // Predicated region
    $region17: #{base_model_forward.6} parent=5 // pred_check
      %p156 = pneg %p155
    $region18: #{base_model_forward.6} parent=5 // pred_check_branch
      %158 = sbr.rel (%p156) target = $region20
    $region19: #{base_model_forward.6} parent=5 // pred_region
      // Predicated region
      $region21: #{base_model_forward.6} parent=19 // pred_check
        %p159 = pneg %p43
      $region22: #{base_model_forward.6} parent=19 // pred_check_branch
        %161 = sbr.rel (%p159) target = $region24
      $region23: #{base_model_forward.6} parent=19 // pred_region
        %s162 = smul.u32 8, %s17
        %p163 = scmp.lt.s32.totalorder %s16, 1
        %s164 = scalar_select %p163, %s16, 1
        %p165 = scmp.lt.s32.totalorder %s162, 7
        %s166 = scalar_select %p165, %s162, 7
        %s167 = smul.addr %s164, 8
        %s168 = sadd.s32 %s166, %s167
        %s169 = smul.addr %s168, 8
        %s170 = scalar_lea.vmem %s0, %s169
        %s171 = smul.u32 8, %s17
      $region24: #{base_model_forward.6} parent=19 // pred_fallthru
        _
      // Predicated region
      $region25: #{base_model_forward.6} parent=19 // pred_check
        %p172 = pneg %p97
      $region26: #{base_model_forward.6} parent=19 // pred_check_branch
        %174 = sbr.rel (%p172) target = $region28
      $region27: #{base_model_forward.6} parent=19 // pred_region
        %s175 = smul.u32 8, %s17
        %p176 = scmp.lt.s32.totalorder %s16, 1
        %s177 = scalar_select %p176, %s16, 1
        %p178 = scmp.lt.s32.totalorder %s175, 7
        %s179 = scalar_select %p178, %s175, 7
        %s180 = smul.addr %s177, 8
        %s181 = sadd.s32 %s179, %s180
        %s182 = smul.addr %s181, 8
        %s183 = scalar_lea.vmem %s2, %s182
        %s184 = smul.u32 8, %s17
      $region28: #{base_model_forward.6} parent=19 // pred_fallthru
        _
    $region20: #{base_model_forward.6} parent=5 // pred_fallthru
      _
    %p185 = scmp.le.s32.totalorder 1, %s9
    %p186 = scmp.lt.s32.totalorder %s9, 3
    %p187 = pnand %p185, %p186
    %p188 = pneg %p187
    // Predicated region
    $region29: #{base_model_forward.6} parent=5 // pred_check
      _
    $region30: #{base_model_forward.6} parent=5 // pred_check_branch
      %190 = sbr.rel (%p187) target = $region32
    $region31: #{base_model_forward.6} parent=5 // pred_region
      %s191 = ssub.s32 %s9, 1
      %s192 = smul.u32 8, %s19
      %p193 = scmp.lt.s32.totalorder %s18, 1
      %s194 = scalar_select %p193, %s18, 1
      %p195 = scmp.lt.s32.totalorder %s192, 7
      %s196 = scalar_select %p195, %s192, 7
      %s197 = smul.addr %s194, 8
      %s198 = sadd.s32 %s196, %s197
      %s199 = smul.addr %s198, 8
      %s200 = scalar_lea.vmem %s0, %s199
      %p201 = pneg %p49
      %p202 = pneg %p46
      %s203 = smul.u32 8, %s19
      %p204 = scmp.lt.s32.totalorder %s203, 7
      %s205 = scalar_select %p204, %s203, 7
      %s206 = smul.addr %s205, 8
      %s207 = scalar_lea.vmem %s1, %s206
      %p208 = pneg %p75
      %p209 = pneg %p72
      %s210 = smul.u32 8, %s19
      %p211 = scmp.lt.s32.totalorder %s18, 1
      %s212 = scalar_select %p211, %s18, 1
      %p213 = scmp.lt.s32.totalorder %s210, 7
      %s214 = scalar_select %p213, %s210, 7
      %s215 = smul.addr %s212, 8
      %s216 = sadd.s32 %s214, %s215
      %s217 = smul.addr %s216, 8
      %s218 = scalar_lea.vmem %s2, %s217
      %p219 = pneg %p103
      %p220 = pneg %p100
      %p221 = pneg %p131
      %p222 = pneg %p128
      %s223 = smul.u32 8, %s19
      %p224 = scmp.lt.s32.totalorder %s18, 1
      %s225 = scalar_select %p224, %s18, 1
      %p226 = scmp.lt.s32.totalorder %s223, 7
      %s227 = scalar_select %p226, %s223, 7
      %s228 = smul.addr %s225, 8
      %s229 = sadd.s32 %s227, %s228
      %s230 = smul.addr %s229, 8
      %s231 = scalar_lea.vmem %s3, %s230
      %s232 = smul.u32 8, %s19
      %p233 = scmp.lt.s32.totalorder %s18, 1
      %s234 = scalar_select %p233, %s18, 1
      %p235 = scmp.lt.s32.totalorder %s232, 7
      %s236 = scalar_select %p235, %s232, 7
      %s237 = smul.addr %s234, 8
      %s238 = sadd.s32 %s236, %s237
      %s239 = smul.addr %s238, 8
      %s240 = scalar_lea.vmem %s0, %s239
      %s241 = smul.u32 8, %s19
      %s242 = smul.u32 8, %s19
      %p243 = scmp.lt.s32.totalorder %s242, 7
      %s244 = scalar_select %p243, %s242, 7
      %s245 = smul.addr %s244, 8
      %s246 = scalar_lea.vmem %s1, %s245
      %s247 = smul.u32 8, %s19
      %s248 = smul.u32 8, %s19
      %p249 = scmp.lt.s32.totalorder %s18, 1
      %s250 = scalar_select %p249, %s18, 1
      %p251 = scmp.lt.s32.totalorder %s248, 7
      %s252 = scalar_select %p251, %s248, 7
      %s253 = smul.addr %s250, 8
      %s254 = sadd.s32 %s252, %s253
      %s255 = smul.addr %s254, 8
      %s256 = scalar_lea.vmem %s2, %s255
      %s257 = smul.u32 8, %s19
      %s258 = smul.u32 8, %s19
      %p259 = scmp.lt.s32.totalorder %s18, 1
      %s260 = scalar_select %p259, %s18, 1
      %p261 = scmp.lt.s32.totalorder %s258, 7
      %s262 = scalar_select %p261, %s258, 7
      %s263 = smul.addr %s260, 8
      %s264 = sadd.s32 %s262, %s263
      %s265 = smul.addr %s264, 8
      %s266 = scalar_lea.vmem %s3, %s265
      %s267 = smul.u32 8, %s19
      %v268 = vld [vmem:[%s240] sm:$0xff]
      %v269 = vld [vmem:[%s240 + $0x8] sm:$0xff]
      %v270 = vld [vmem:[%s240 + $0x10] sm:$0xff]
      %v271 = vld [vmem:[%s240 + $0x18] sm:$0xff]
      %v272 = vld [vmem:[%s240 + $0x20] sm:$0xff]
      %v273 = vld [vmem:[%s240 + $0x28] sm:$0xff]
      %v274 = vld [vmem:[%s240 + $0x30] sm:$0xff]
      %v275 = vld [vmem:[%s240 + $0x38] sm:$0xff]
      %v276 = vld [vmem:[%s246] sm:$0xff]
      %v277 = vld [vmem:[%s246 + $0x8] sm:$0xff]
      %v278 = vld [vmem:[%s246 + $0x10] sm:$0xff]
      %v279 = vld [vmem:[%s246 + $0x18] sm:$0xff]
      %v280 = vld [vmem:[%s246 + $0x20] sm:$0xff]
      %v281 = vld [vmem:[%s246 + $0x28] sm:$0xff]
      %v282 = vld [vmem:[%s246 + $0x30] sm:$0xff]
      %v283 = vld [vmem:[%s246 + $0x38] sm:$0xff]
      %285 = vset.pattern.permute.xlu0 0
      %286 = vperm.xlu0 %285, %v276
      %v287 = vpop.permute.xlu0 %286
      %290 = vset.pattern.permute.xlu0 0
      %291 = vperm.xlu0 %290, %v277
      %v292 = vpop.permute.xlu0 %291
      %295 = vset.pattern.permute.xlu0 0
      %296 = vperm.xlu0 %295, %v278
      %v297 = vpop.permute.xlu0 %296
      %300 = vset.pattern.permute.xlu0 0
      %301 = vperm.xlu0 %300, %v279
      %v302 = vpop.permute.xlu0 %301
      %305 = vset.pattern.permute.xlu0 0
      %306 = vperm.xlu0 %305, %v280
      %v307 = vpop.permute.xlu0 %306
      %310 = vset.pattern.permute.xlu0 0
      %311 = vperm.xlu0 %310, %v281
      %v312 = vpop.permute.xlu0 %311
      %315 = vset.pattern.permute.xlu0 0
      %316 = vperm.xlu0 %315, %v282
      %v317 = vpop.permute.xlu0 %316
      %320 = vset.pattern.permute.xlu0 0
      %321 = vperm.xlu0 %320, %v283
      %v322 = vpop.permute.xlu0 %321
      %v324 = vadd.f32 %v268, %v287
      %v325 = vadd.f32 %v269, %v292
      %v326 = vadd.f32 %v270, %v297
      %v327 = vadd.f32 %v271, %v302
      %v328 = vadd.f32 %v272, %v307
      %v329 = vadd.f32 %v273, %v312
      %v330 = vadd.f32 %v274, %v317
      %v331 = vadd.f32 %v275, %v322
      %v332 = vmin.f32 %v324, 20.0
      %v333 = vmin.f32 %v325, 20.0
      %v334 = vmin.f32 %v326, 20.0
      %v335 = vmin.f32 %v327, 20.0
      %v336 = vmin.f32 %v328, 20.0
      %v337 = vmin.f32 %v329, 20.0
      %v338 = vmin.f32 %v330, 20.0
      %v339 = vmin.f32 %v331, 20.0
      %v340 = vmul.f32 %v332, 1.442695
      %v341 = vpow.pop %v340
      %v342 = vmul.f32 %v333, 1.442695
      %v343 = vpow.pop %v342
      %v344 = vmul.f32 %v334, 1.442695
      %v345 = vpow.pop %v344
      %v346 = vmul.f32 %v335, 1.442695
      %v347 = vpow.pop %v346
      %v348 = vmul.f32 %v336, 1.442695
      %v349 = vpow.pop %v348
      %v350 = vmul.f32 %v337, 1.442695
      %v351 = vpow.pop %v350
      %v352 = vmul.f32 %v338, 1.442695
      %v353 = vpow.pop %v352
      %v354 = vmul.f32 %v339, 1.442695
      %v355 = vpow.pop %v354
      %v356 = vadd.f32 %v341, 2.0
      %v357 = vadd.f32 %v343, 2.0
      %v358 = vadd.f32 %v345, 2.0
      %v359 = vadd.f32 %v347, 2.0
      %v360 = vadd.f32 %v349, 2.0
      %v361 = vadd.f32 %v351, 2.0
      %v362 = vadd.f32 %v353, 2.0
      %v363 = vadd.f32 %v355, 2.0
      %v364 = vmul.f32 %v341, %v356
      %v365 = vmul.f32 %v343, %v357
      %v366 = vmul.f32 %v345, %v358
      %v367 = vmul.f32 %v347, %v359
      %v368 = vmul.f32 %v349, %v360
      %v369 = vmul.f32 %v351, %v361
      %v370 = vmul.f32 %v353, %v362
      %v371 = vmul.f32 %v355, %v363
      %vm372 = vcmp.gt.f32.partialorder %v324, 20.0
      %vm373 = vcmp.gt.f32.partialorder %v325, 20.0
      %vm374 = vcmp.gt.f32.partialorder %v326, 20.0
      %vm375 = vcmp.gt.f32.partialorder %v327, 20.0
      %vm376 = vcmp.gt.f32.partialorder %v328, 20.0
      %vm377 = vcmp.gt.f32.partialorder %v329, 20.0
      %vm378 = vcmp.gt.f32.partialorder %v330, 20.0
      %vm379 = vcmp.gt.f32.partialorder %v331, 20.0
      %v380 = vadd.f32 %v364, 2.0
      %v381 = vadd.f32 %v365, 2.0
      %v382 = vadd.f32 %v366, 2.0
      %v383 = vadd.f32 %v367, 2.0
      %v384 = vadd.f32 %v368, 2.0
      %v385 = vadd.f32 %v369, 2.0
      %v386 = vadd.f32 %v370, 2.0
      %v387 = vadd.f32 %v371, 2.0
      %v388 = vrcp.pop %v380
      %v389 = vmul.f32 %v364, %v388
      %v390 = vrcp.pop %v381
      %v391 = vmul.f32 %v365, %v390
      %v392 = vrcp.pop %v382
      %v393 = vmul.f32 %v366, %v392
      %v394 = vrcp.pop %v383
      %v395 = vmul.f32 %v367, %v394
      %v396 = vrcp.pop %v384
      %v397 = vmul.f32 %v368, %v396
      %v398 = vrcp.pop %v385
      %v399 = vmul.f32 %v369, %v398
      %v400 = vrcp.pop %v386
      %v401 = vmul.f32 %v370, %v400
      %v402 = vrcp.pop %v387
      %v403 = vmul.f32 %v371, %v402
      %v404 = vmul.f32 %v324, %v389
      %v405 = vmul.f32 %v325, %v391
      %v406 = vmul.f32 %v326, %v393
      %v407 = vmul.f32 %v327, %v395
      %v408 = vmul.f32 %v328, %v397
      %v409 = vmul.f32 %v329, %v399
      %v410 = vmul.f32 %v330, %v401
      %v411 = vmul.f32 %v331, %v403
      %v412 = vsel %vm372, %v324, %v404
      %v413 = vsel %vm373, %v325, %v405
      %v414 = vsel %vm374, %v326, %v406
      %v415 = vsel %vm375, %v327, %v407
      %v416 = vsel %vm376, %v328, %v408
      %v417 = vsel %vm377, %v329, %v409
      %v418 = vsel %vm378, %v330, %v410
      %v419 = vsel %vm379, %v331, %v411
      %v420 = vld [vmem:[%s256] sm:$0xff]
      %v421 = vld [vmem:[%s256 + $0x8] sm:$0xff]
      %v422 = vld [vmem:[%s256 + $0x10] sm:$0xff]
      %v423 = vld [vmem:[%s256 + $0x18] sm:$0xff]
      %v424 = vld [vmem:[%s256 + $0x20] sm:$0xff]
      %v425 = vld [vmem:[%s256 + $0x28] sm:$0xff]
      %v426 = vld [vmem:[%s256 + $0x30] sm:$0xff]
      %v427 = vld [vmem:[%s256 + $0x38] sm:$0xff]
      %v428 = vadd.f32 %v412, %v420
      %v429 = vadd.f32 %v413, %v421
      %v430 = vadd.f32 %v414, %v422
      %v431 = vadd.f32 %v415, %v423
      %v432 = vadd.f32 %v416, %v424
      %v433 = vadd.f32 %v417, %v425
      %v434 = vadd.f32 %v418, %v426
      %v435 = vadd.f32 %v419, %v427
      %vm436 = vcmask 72704
      %437 = vst.msk [vmem:[%s266] sm:$0xff] %vm436, %v428
      %438 = vst.msk [vmem:[%s266 + $0x8] sm:$0xff] %vm436, %v429
      %439 = vst.msk [vmem:[%s266 + $0x10] sm:$0xff] %vm436, %v430
      %440 = vst.msk [vmem:[%s266 + $0x18] sm:$0xff] %vm436, %v431
      %441 = vst.msk [vmem:[%s266 + $0x20] sm:$0xff] %vm436, %v432
      %442 = vst.msk [vmem:[%s266 + $0x28] sm:$0xff] %vm436, %v433
      %443 = vst.msk [vmem:[%s266 + $0x30] sm:$0xff] %vm436, %v434
      %444 = vst.msk [vmem:[%s266 + $0x38] sm:$0xff] %vm436, %v435
      %s445 = smul.u32 8, %s19
      %p446 = scmp.lt.s32.totalorder %s18, 1
      %s447 = scalar_select %p446, %s18, 1
      %p448 = scmp.lt.s32.totalorder %s445, 7
      %s449 = scalar_select %p448, %s445, 7
      %s450 = smul.addr %s447, 8
      %s451 = sadd.s32 %s449, %s450
      %s452 = smul.addr %s451, 8
      %s453 = scalar_lea.vmem %s3, %s452
      // Predicated region
      $region33: #{base_model_forward.6} parent=31 // pred_check
        %p454 = pneg %p128
      $region34: #{base_model_forward.6} parent=31 // pred_check_branch
        %456 = sbr.rel (%p454) target = $region36
      $region35: #{base_model_forward.6} parent=31 // pred_region
        %s457 = smul.u32 8, %s19
      $region36: #{base_model_forward.6} parent=31 // pred_fallthru
        _
    $region32: #{base_model_forward.6} parent=5 // pred_fallthru
      _
    %p458 = scmp.le.s32.totalorder 2, %s9
    // Predicated region
    $region37: #{base_model_forward.6} parent=5 // pred_check
      %p459 = pneg %p458
    $region38: #{base_model_forward.6} parent=5 // pred_check_branch
      %461 = sbr.rel (%p459) target = $region40
    $region39: #{base_model_forward.6} parent=5 // pred_region
      %s462 = ssub.s32 %s9, 2
      // Predicated region
      $region41: #{base_model_forward.6} parent=39 // pred_check
        %p463 = pneg %p134
      $region42: #{base_model_forward.6} parent=39 // pred_check_branch
        %465 = sbr.rel (%p463) target = $region44
      $region43: #{base_model_forward.6} parent=39 // pred_region
        %s466 = smul.u32 8, %s21
        %p467 = scmp.lt.s32.totalorder %s20, 1
        %s468 = scalar_select %p467, %s20, 1
        %p469 = scmp.lt.s32.totalorder %s466, 7
        %s470 = scalar_select %p469, %s466, 7
        %s471 = smul.addr %s468, 8
        %s472 = sadd.s32 %s470, %s471
        %s473 = smul.addr %s472, 8
        %s474 = scalar_lea.vmem %s3, %s473
      $region44: #{base_model_forward.6} parent=39 // pred_fallthru
        _
    $region40: #{base_model_forward.6} parent=5 // pred_fallthru
      _
  $region6: #{base_model_forward.6} parent=0 // loop_footer
    %s13 = sadd.s32 1, %s9
  $region7: #{base_model_forward.6} parent=0 // loop_footer_branch
    %8 = sbr.rel target = $region3
  $region8: #{base_model_forward.6} parent=0 // loop_exit
    _

// kernel: base_model_forward.5
$region0: #{base_model_forward.5}
  #allocation0 [shape = 'u32[]', space=smem, size = 0x4, offset = 0x4, fixed_abs, tag = 'smem constant byte address 0x4 - core index']
  #allocation1 [shape = 'u32[144,128]{1,0:T(1,128)}', space=vmem, size = 0x12000, scoped, tag = 'internal scratch']
  %s0 = inlined_call_operand.vmem [shape: f32[2,64,16], index: 0, kind: input, shape index: {}]
  %s1 = inlined_call_operand.vmem [shape: f32[64,1], index: 1, kind: input, shape index: {}]
  %s2 = inlined_call_operand.vmem [shape: f32[2,64,16], index: 2, kind: output, shape index: {}]
  %s3 = sld [smem:[#allocation0]]
  $region41: #{base_model_forward.5} parent=0
    _
  %s5 = ssub.s32 1, %s3
  %s6 = scalar_select 0, %s5, %s3
  loop: start=0, step=1, limit=4
  $region2: #{base_model_forward.5} parent=0 // loop_pre_header
    _
  $region3: #{base_model_forward.5} parent=0 // loop_header
    %s8 = sphi 0, %s12
    %p9 = scmp.ge.s32.totalorder %s8, 4
    %s15 = sphi 0, %s27
    %s16 = sphi 0, %s23
    %s17 = sphi 0, %s15
    %s18 = sphi 0, %s16
    %s19 = sphi 0, %s17
    %s20 = sphi 0, %s18
    %s32 = sphi 0, %s34
    %s35 = sphi 0, %s32
    %s36 = sphi 0, %s35
    %s52 = sphi 0, %s36
    %s58 = sphi 0, %s60
    %s61 = sphi 0, %s58
    %s62 = sphi 0, %s61
    %s78 = sphi 0, %s62
    %s86 = sphi 0, %s88
    %s89 = sphi 0, %s86
    %s90 = sphi 0, %s89
    %s106 = sphi 0, %s90
  $region4: #{base_model_forward.5} parent=0 // loop_header_branch
    %11 = sbr.rel (%p9) target = $region8
  $region5: #{base_model_forward.5} parent=0 // loop_body
    %s13 = ssub.s32 %s8, 1
    %s14 = ssub.s32 %s8, 2
    %s21 = sadd.s32 1, %s16
    %p22 = scmp.ge.s32.totalorder %s21, 1
    %s23 = scalar_select %p22, 0, %s21
    %s24 = sadd.s32 1, %s15
    %s25 = scalar_select %p22, %s24, %s15
    %p26 = scmp.ge.s32.totalorder %s25, 2
    %s27 = scalar_select %p26, 0, %s25
    %s28 = ssub.s32 %s15, %s27
    %s29 = ssub.s32 %s16, %s23
    %s30 = sor.u32 %s28, %s29
    %p31 = scmp.eq.s32.totalorder %s30, 0
    %s33 = sadd.s32 %s32, 1
    %s34 = scalar_select %p31, %s32, %s33
    %p37 = pneg %p31
    %p38 = scmp.eq.s32.totalorder %s8, 1
    %p39 = por %p37, %p38
    %p40 = scmp.ne.s32.totalorder %s32, %s35
    %p41 = scmp.eq.s32.totalorder %s8, 0
    %p42 = por %p40, %p41
    %p43 = scmp.ne.s32.totalorder %s32, %s35
    %p44 = scmp.eq.s32.totalorder %s13, 1
    %p45 = por %p43, %p44
    %p46 = scmp.ne.s32.totalorder %s35, %s36
    %p47 = scmp.eq.s32.totalorder %s13, 0
    %p48 = por %p46, %p47
    %p49 = scmp.ne.s32.totalorder %s35, %s36
    %p50 = scmp.eq.s32.totalorder %s14, 1
    %p51 = por %p49, %p50
    %p53 = scmp.ne.s32.totalorder %s36, %s52
    %p54 = scmp.eq.s32.totalorder %s14, 0
    %p55 = por %p53, %p54
    %s56 = ssub.s32 %s16, %s23
    %p57 = scmp.eq.s32.totalorder %s56, 0
    %s59 = sadd.s32 %s58, 1
    %s60 = scalar_select %p57, %s58, %s59
    %p63 = pneg %p57
    %p64 = scmp.eq.s32.totalorder %s8, 1
    %p65 = por %p63, %p64
    %p66 = scmp.ne.s32.totalorder %s58, %s61
    %p67 = scmp.eq.s32.totalorder %s8, 0
    %p68 = por %p66, %p67
    %p69 = scmp.ne.s32.totalorder %s58, %s61
    %p70 = scmp.eq.s32.totalorder %s13, 1
    %p71 = por %p69, %p70
    %p72 = scmp.ne.s32.totalorder %s61, %s62
    %p73 = scmp.eq.s32.totalorder %s13, 0
    %p74 = por %p72, %p73
    %p75 = scmp.ne.s32.totalorder %s61, %s62
    %p76 = scmp.eq.s32.totalorder %s14, 1
    %p77 = por %p75, %p76
    %p79 = scmp.ne.s32.totalorder %s62, %s78
    %p80 = scmp.eq.s32.totalorder %s14, 0
    %p81 = por %p79, %p80
    %s82 = ssub.s32 %s15, %s27
    %s83 = ssub.s32 %s16, %s23
    %s84 = sor.u32 %s82, %s83
    %p85 = scmp.eq.s32.totalorder %s84, 0
    %s87 = sadd.s32 %s86, 1
    %s88 = scalar_select %p85, %s86, %s87
    %p91 = pneg %p85
    %p92 = scmp.eq.s32.totalorder %s8, 1
    %p93 = por %p91, %p92
    %p94 = scmp.ne.s32.totalorder %s86, %s89
    %p95 = scmp.eq.s32.totalorder %s8, 0
    %p96 = por %p94, %p95
    %p97 = scmp.ne.s32.totalorder %s86, %s89
    %p98 = scmp.eq.s32.totalorder %s13, 1
    %p99 = por %p97, %p98
    %p100 = scmp.ne.s32.totalorder %s89, %s90
    %p101 = scmp.eq.s32.totalorder %s13, 0
    %p102 = por %p100, %p101
    %p103 = scmp.ne.s32.totalorder %s89, %s90
    %p104 = scmp.eq.s32.totalorder %s14, 1
    %p105 = por %p103, %p104
    %p107 = scmp.ne.s32.totalorder %s90, %s106
    %p108 = scmp.eq.s32.totalorder %s14, 0
    %p109 = por %p107, %p108
    %p110 = scmp.le.s32.totalorder 1, %s8
    %p111 = scmp.lt.s32.totalorder %s8, 3
    %p112 = pnand %p110, %p111
    %p113 = pneg %p112
    // Predicated region
    $region9: #{base_model_forward.5} parent=5 // pred_check
      _
    $region10: #{base_model_forward.5} parent=5 // pred_check_branch
      %115 = sbr.rel (%p112) target = $region12
    $region11: #{base_model_forward.5} parent=5 // pred_region
      %s116 = ssub.s32 %s8, 1
      // Predicated region
      $region13: #{base_model_forward.5} parent=11 // pred_check
        %p117 = pneg %p74
      $region14: #{base_model_forward.5} parent=11 // pred_check_branch
        %119 = sbr.rel (%p117) target = $region16
      $region15: #{base_model_forward.5} parent=11 // pred_region
        %s120 = smul.u32 8, %s18
        %p121 = scmp.lt.s32.totalorder %s120, 7
        %s122 = scalar_select %p121, %s120, 7
        %s123 = smul.addr %s122, 8
        %s124 = scalar_lea.vmem %s1, %s123
        %s125 = smul.u32 8, %s18
      $region16: #{base_model_forward.5} parent=11 // pred_fallthru
        _
    $region12: #{base_model_forward.5} parent=5 // pred_fallthru
      _
    %p126 = scmp.lt.s32.totalorder %s8, 2
    // Predicated region
    $region17: #{base_model_forward.5} parent=5 // pred_check
      %p127 = pneg %p126
    $region18: #{base_model_forward.5} parent=5 // pred_check_branch
      %129 = sbr.rel (%p127) target = $region20
    $region19: #{base_model_forward.5} parent=5 // pred_region
      // Predicated region
      $region21: #{base_model_forward.5} parent=19 // pred_check
        %p130 = pneg %p42
      $region22: #{base_model_forward.5} parent=19 // pred_check_branch
        %132 = sbr.rel (%p130) target = $region24
      $region23: #{base_model_forward.5} parent=19 // pred_region
        %s133 = smul.u32 8, %s16
        %p134 = scmp.lt.s32.totalorder %s15, 1
        %s135 = scalar_select %p134, %s15, 1
        %p136 = scmp.lt.s32.totalorder %s133, 7
        %s137 = scalar_select %p136, %s133, 7
        %s138 = smul.addr %s135, 8
        %s139 = sadd.s32 %s137, %s138
        %s140 = smul.addr %s139, 8
        %s141 = scalar_lea.vmem %s0, %s140
        %s142 = smul.u32 8, %s16
      $region24: #{base_model_forward.5} parent=19 // pred_fallthru
        _
    $region20: #{base_model_forward.5} parent=5 // pred_fallthru
      _
    %p143 = scmp.le.s32.totalorder 1, %s8
    %p144 = scmp.lt.s32.totalorder %s8, 3
    %p145 = pnand %p143, %p144
    %p146 = pneg %p145
    // Predicated region
    $region25: #{base_model_forward.5} parent=5 // pred_check
      _
    $region26: #{base_model_forward.5} parent=5 // pred_check_branch
      %148 = sbr.rel (%p145) target = $region28
    $region27: #{base_model_forward.5} parent=5 // pred_region
      %s149 = ssub.s32 %s8, 1
      %s150 = smul.u32 8, %s18
      %p151 = scmp.lt.s32.totalorder %s17, 1
      %s152 = scalar_select %p151, %s17, 1
      %p153 = scmp.lt.s32.totalorder %s150, 7
      %s154 = scalar_select %p153, %s150, 7
      %s155 = smul.addr %s152, 8
      %s156 = sadd.s32 %s154, %s155
      %s157 = smul.addr %s156, 8
      %s158 = scalar_lea.vmem %s0, %s157
      %p159 = pneg %p48
      %p160 = pneg %p45
      %s161 = smul.u32 8, %s18
      %p162 = scmp.lt.s32.totalorder %s161, 7
      %s163 = scalar_select %p162, %s161, 7
      %s164 = smul.addr %s163, 8
      %s165 = scalar_lea.vmem %s1, %s164
      %p166 = pneg %p74
      %p167 = pneg %p71
      %p168 = pneg %p102
      %p169 = pneg %p99
      %s170 = smul.u32 8, %s18
      %p171 = scmp.lt.s32.totalorder %s17, 1
      %s172 = scalar_select %p171, %s17, 1
      %p173 = scmp.lt.s32.totalorder %s170, 7
      %s174 = scalar_select %p173, %s170, 7
      %s175 = smul.addr %s172, 8
      %s176 = sadd.s32 %s174, %s175
      %s177 = smul.addr %s176, 8
      %s178 = scalar_lea.vmem %s2, %s177
      %s179 = smul.u32 8, %s18
      %p180 = scmp.lt.s32.totalorder %s17, 1
      %s181 = scalar_select %p180, %s17, 1
      %p182 = scmp.lt.s32.totalorder %s179, 7
      %s183 = scalar_select %p182, %s179, 7
      %s184 = smul.addr %s181, 8
      %s185 = sadd.s32 %s183, %s184
      %s186 = smul.addr %s185, 8
      %s187 = scalar_lea.vmem %s0, %s186
      %s188 = smul.u32 8, %s18
      %s189 = smul.u32 8, %s18
      %p190 = scmp.lt.s32.totalorder %s189, 7
      %s191 = scalar_select %p190, %s189, 7
      %s192 = smul.addr %s191, 8
      %s193 = scalar_lea.vmem %s1, %s192
      %s194 = smul.u32 8, %s18
      %s195 = smul.u32 8, %s18
      %p196 = scmp.lt.s32.totalorder %s17, 1
      %s197 = scalar_select %p196, %s17, 1
      %p198 = scmp.lt.s32.totalorder %s195, 7
      %s199 = scalar_select %p198, %s195, 7
      %s200 = smul.addr %s197, 8
      %s201 = sadd.s32 %s199, %s200
      %s202 = smul.addr %s201, 8
      %s203 = scalar_lea.vmem %s2, %s202
      %s204 = smul.u32 8, %s18
      %v205 = vld [vmem:[%s187] sm:$0xff]
      %v206 = vld [vmem:[%s187 + $0x8] sm:$0xff]
      %v207 = vld [vmem:[%s187 + $0x10] sm:$0xff]
      %v208 = vld [vmem:[%s187 + $0x18] sm:$0xff]
      %v209 = vld [vmem:[%s187 + $0x20] sm:$0xff]
      %v210 = vld [vmem:[%s187 + $0x28] sm:$0xff]
      %v211 = vld [vmem:[%s187 + $0x30] sm:$0xff]
      %v212 = vld [vmem:[%s187 + $0x38] sm:$0xff]
      %v213 = vld [vmem:[%s193] sm:$0xff]
      %v214 = vld [vmem:[%s193 + $0x8] sm:$0xff]
      %v215 = vld [vmem:[%s193 + $0x10] sm:$0xff]
      %v216 = vld [vmem:[%s193 + $0x18] sm:$0xff]
      %v217 = vld [vmem:[%s193 + $0x20] sm:$0xff]
      %v218 = vld [vmem:[%s193 + $0x28] sm:$0xff]
      %v219 = vld [vmem:[%s193 + $0x30] sm:$0xff]
      %v220 = vld [vmem:[%s193 + $0x38] sm:$0xff]
      %222 = vset.pattern.permute.xlu0 0
      %223 = vperm.xlu0 %222, %v213
      %v224 = vpop.permute.xlu0 %223
      %227 = vset.pattern.permute.xlu0 0
      %228 = vperm.xlu0 %227, %v214
      %v229 = vpop.permute.xlu0 %228
      %232 = vset.pattern.permute.xlu0 0
      %233 = vperm.xlu0 %232, %v215
      %v234 = vpop.permute.xlu0 %233
      %237 = vset.pattern.permute.xlu0 0
      %238 = vperm.xlu0 %237, %v216
      %v239 = vpop.permute.xlu0 %238
      %242 = vset.pattern.permute.xlu0 0
      %243 = vperm.xlu0 %242, %v217
      %v244 = vpop.permute.xlu0 %243
      %247 = vset.pattern.permute.xlu0 0
      %248 = vperm.xlu0 %247, %v218
      %v249 = vpop.permute.xlu0 %248
      %252 = vset.pattern.permute.xlu0 0
      %253 = vperm.xlu0 %252, %v219
      %v254 = vpop.permute.xlu0 %253
      %257 = vset.pattern.permute.xlu0 0
      %258 = vperm.xlu0 %257, %v220
      %v259 = vpop.permute.xlu0 %258
      %v261 = vadd.f32 %v205, %v224
      %v262 = vadd.f32 %v206, %v229
      %v263 = vadd.f32 %v207, %v234
      %v264 = vadd.f32 %v208, %v239
      %v265 = vadd.f32 %v209, %v244
      %v266 = vadd.f32 %v210, %v249
      %v267 = vadd.f32 %v211, %v254
      %v268 = vadd.f32 %v212, %v259
      %v269 = vmin.f32 %v261, 20.0
      %v270 = vmin.f32 %v262, 20.0
      %v271 = vmin.f32 %v263, 20.0
      %v272 = vmin.f32 %v264, 20.0
      %v273 = vmin.f32 %v265, 20.0
      %v274 = vmin.f32 %v266, 20.0
      %v275 = vmin.f32 %v267, 20.0
      %v276 = vmin.f32 %v268, 20.0
      %v277 = vmul.f32 %v269, 1.442695
      %v278 = vpow.pop %v277
      %v279 = vmul.f32 %v270, 1.442695
      %v280 = vpow.pop %v279
      %v281 = vmul.f32 %v271, 1.442695
      %v282 = vpow.pop %v281
      %v283 = vmul.f32 %v272, 1.442695
      %v284 = vpow.pop %v283
      %v285 = vmul.f32 %v273, 1.442695
      %v286 = vpow.pop %v285
      %v287 = vmul.f32 %v274, 1.442695
      %v288 = vpow.pop %v287
      %v289 = vmul.f32 %v275, 1.442695
      %v290 = vpow.pop %v289
      %v291 = vmul.f32 %v276, 1.442695
      %v292 = vpow.pop %v291
      %v293 = vadd.f32 %v278, 2.0
      %v294 = vadd.f32 %v280, 2.0
      %v295 = vadd.f32 %v282, 2.0
      %v296 = vadd.f32 %v284, 2.0
      %v297 = vadd.f32 %v286, 2.0
      %v298 = vadd.f32 %v288, 2.0
      %v299 = vadd.f32 %v290, 2.0
      %v300 = vadd.f32 %v292, 2.0
      %v301 = vmul.f32 %v278, %v293
      %v302 = vmul.f32 %v280, %v294
      %v303 = vmul.f32 %v282, %v295
      %v304 = vmul.f32 %v284, %v296
      %v305 = vmul.f32 %v286, %v297
      %v306 = vmul.f32 %v288, %v298
      %v307 = vmul.f32 %v290, %v299
      %v308 = vmul.f32 %v292, %v300
      %vm309 = vcmp.gt.f32.partialorder %v261, 20.0
      %vm310 = vcmp.gt.f32.partialorder %v262, 20.0
      %vm311 = vcmp.gt.f32.partialorder %v263, 20.0
      %vm312 = vcmp.gt.f32.partialorder %v264, 20.0
      %vm313 = vcmp.gt.f32.partialorder %v265, 20.0
      %vm314 = vcmp.gt.f32.partialorder %v266, 20.0
      %vm315 = vcmp.gt.f32.partialorder %v267, 20.0
      %vm316 = vcmp.gt.f32.partialorder %v268, 20.0
      %v317 = vadd.f32 %v301, 2.0
      %v318 = vadd.f32 %v302, 2.0
      %v319 = vadd.f32 %v303, 2.0
      %v320 = vadd.f32 %v304, 2.0
      %v321 = vadd.f32 %v305, 2.0
      %v322 = vadd.f32 %v306, 2.0
      %v323 = vadd.f32 %v307, 2.0
      %v324 = vadd.f32 %v308, 2.0
      %v325 = vrcp.pop %v317
      %v326 = vmul.f32 %v301, %v325
      %v327 = vrcp.pop %v318
      %v328 = vmul.f32 %v302, %v327
      %v329 = vrcp.pop %v319
      %v330 = vmul.f32 %v303, %v329
      %v331 = vrcp.pop %v320
      %v332 = vmul.f32 %v304, %v331
      %v333 = vrcp.pop %v321
      %v334 = vmul.f32 %v305, %v333
      %v335 = vrcp.pop %v322
      %v336 = vmul.f32 %v306, %v335
      %v337 = vrcp.pop %v323
      %v338 = vmul.f32 %v307, %v337
      %v339 = vrcp.pop %v324
      %v340 = vmul.f32 %v308, %v339
      %v341 = vmul.f32 %v261, %v326
      %v342 = vmul.f32 %v262, %v328
      %v343 = vmul.f32 %v263, %v330
      %v344 = vmul.f32 %v264, %v332
      %v345 = vmul.f32 %v265, %v334
      %v346 = vmul.f32 %v266, %v336
      %v347 = vmul.f32 %v267, %v338
      %v348 = vmul.f32 %v268, %v340
      %v349 = vsel %vm309, %v261, %v341
      %v350 = vsel %vm310, %v262, %v342
      %v351 = vsel %vm311, %v263, %v343
      %v352 = vsel %vm312, %v264, %v344
      %v353 = vsel %vm313, %v265, %v345
      %v354 = vsel %vm314, %v266, %v346
      %v355 = vsel %vm315, %v267, %v347
      %v356 = vsel %vm316, %v268, %v348
      %vm357 = vcmask 130048
      %358 = vst.msk [vmem:[%s203] sm:$0xff] %vm357, %v349
      %359 = vst.msk [vmem:[%s203 + $0x8] sm:$0xff] %vm357, %v350
      %360 = vst.msk [vmem:[%s203 + $0x10] sm:$0xff] %vm357, %v351
      %361 = vst.msk [vmem:[%s203 + $0x18] sm:$0xff] %vm357, %v352
      %362 = vst.msk [vmem:[%s203 + $0x20] sm:$0xff] %vm357, %v353
      %363 = vst.msk [vmem:[%s203 + $0x28] sm:$0xff] %vm357, %v354
      %364 = vst.msk [vmem:[%s203 + $0x30] sm:$0xff] %vm357, %v355
      %365 = vst.msk [vmem:[%s203 + $0x38] sm:$0xff] %vm357, %v356
      %s366 = smul.u32 8, %s18
      %p367 = scmp.lt.s32.totalorder %s17, 1
      %s368 = scalar_select %p367, %s17, 1
      %p369 = scmp.lt.s32.totalorder %s366, 7
      %s370 = scalar_select %p369, %s366, 7
      %s371 = smul.addr %s368, 8
      %s372 = sadd.s32 %s370, %s371
      %s373 = smul.addr %s372, 8
      %s374 = scalar_lea.vmem %s2, %s373
      // Predicated region
      $region29: #{base_model_forward.5} parent=27 // pred_check
        %p375 = pneg %p99
      $region30: #{base_model_forward.5} parent=27 // pred_check_branch
        %377 = sbr.rel (%p375) target = $region32
      $region31: #{base_model_forward.5} parent=27 // pred_region
        %s378 = smul.u32 8, %s18
      $region32: #{base_model_forward.5} parent=27 // pred_fallthru
        _
    $region28: #{base_model_forward.5} parent=5 // pred_fallthru
      _
    %p379 = scmp.le.s32.totalorder 2, %s8
    // Predicated region
    $region33: #{base_model_forward.5} parent=5 // pred_check
      %p380 = pneg %p379
    $region34: #{base_model_forward.5} parent=5 // pred_check_branch
      %382 = sbr.rel (%p380) target = $region36
    $region35: #{base_model_forward.5} parent=5 // pred_region
      %s383 = ssub.s32 %s8, 2
      // Predicated region
      $region37: #{base_model_forward.5} parent=35 // pred_check
        %p384 = pneg %p105
      $region38: #{base_model_forward.5} parent=35 // pred_check_branch
        %386 = sbr.rel (%p384) target = $region40
      $region39: #{base_model_forward.5} parent=35 // pred_region
        %s387 = smul.u32 8, %s20
        %p388 = scmp.lt.s32.totalorder %s19, 1
        %s389 = scalar_select %p388, %s19, 1
        %p390 = scmp.lt.s32.totalorder %s387, 7
        %s391 = scalar_select %p390, %s387, 7
        %s392 = smul.addr %s389, 8
        %s393 = sadd.s32 %s391, %s392
        %s394 = smul.addr %s393, 8
        %s395 = scalar_lea.vmem %s2, %s394
      $region40: #{base_model_forward.5} parent=35 // pred_fallthru
        _
    $region36: #{base_model_forward.5} parent=5 // pred_fallthru
      _
  $region6: #{base_model_forward.5} parent=0 // loop_footer
    %s12 = sadd.s32 1, %s8
  $region7: #{base_model_forward.5} parent=0 // loop_footer_branch
    %7 = sbr.rel target = $region3
  $region8: #{base_model_forward.5} parent=0 // loop_exit
    _

// kernel: base_model_forward.7
$region0: #{base_model_forward.7}
  #allocation0 [shape = 'u32[]', space=smem, size = 0x4, offset = 0x4, fixed_abs, tag = 'smem constant byte address 0x4 - core index']
  #allocation1 [shape = 'u32[144,128]{1,0:T(1,128)}', space=vmem, size = 0x12000, scoped, tag = 'internal scratch']
  %s0 = inlined_call_operand.vmem [shape: f32[2,128,9], index: 0, kind: input, shape index: {}]
  %s1 = inlined_call_operand.vmem [shape: f32[128,1], index: 1, kind: input, shape index: {}]
  %s2 = inlined_call_operand.vmem [shape: f32[2,128,9], index: 2, kind: output, shape index: {}]
  %s3 = sld [smem:[#allocation0]]
  $region41: #{base_model_forward.7} parent=0
    _
  %s5 = ssub.s32 1, %s3
  %s6 = scalar_select 0, %s5, %s3
  loop: start=0, step=1, limit=4
  $region2: #{base_model_forward.7} parent=0 // loop_pre_header
    _
  $region3: #{base_model_forward.7} parent=0 // loop_header
    %s8 = sphi 0, %s12
    %p9 = scmp.ge.s32.totalorder %s8, 4
    %s15 = sphi 0, %s27
    %s16 = sphi 0, %s23
    %s17 = sphi 0, %s15
    %s18 = sphi 0, %s16
    %s19 = sphi 0, %s17
    %s20 = sphi 0, %s18
    %s32 = sphi 0, %s34
    %s35 = sphi 0, %s32
    %s36 = sphi 0, %s35
    %s52 = sphi 0, %s36
    %s58 = sphi 0, %s60
    %s61 = sphi 0, %s58
    %s62 = sphi 0, %s61
    %s78 = sphi 0, %s62
    %s86 = sphi 0, %s88
    %s89 = sphi 0, %s86
    %s90 = sphi 0, %s89
    %s106 = sphi 0, %s90
  $region4: #{base_model_forward.7} parent=0 // loop_header_branch
    %11 = sbr.rel (%p9) target = $region8
  $region5: #{base_model_forward.7} parent=0 // loop_body
    %s13 = ssub.s32 %s8, 1
    %s14 = ssub.s32 %s8, 2
    %s21 = sadd.s32 1, %s16
    %p22 = scmp.ge.s32.totalorder %s21, 1
    %s23 = scalar_select %p22, 0, %s21
    %s24 = sadd.s32 1, %s15
    %s25 = scalar_select %p22, %s24, %s15
    %p26 = scmp.ge.s32.totalorder %s25, 2
    %s27 = scalar_select %p26, 0, %s25
    %s28 = ssub.s32 %s15, %s27
    %s29 = ssub.s32 %s16, %s23
    %s30 = sor.u32 %s28, %s29
    %p31 = scmp.eq.s32.totalorder %s30, 0
    %s33 = sadd.s32 %s32, 1
    %s34 = scalar_select %p31, %s32, %s33
    %p37 = pneg %p31
    %p38 = scmp.eq.s32.totalorder %s8, 1
    %p39 = por %p37, %p38
    %p40 = scmp.ne.s32.totalorder %s32, %s35
    %p41 = scmp.eq.s32.totalorder %s8, 0
    %p42 = por %p40, %p41
    %p43 = scmp.ne.s32.totalorder %s32, %s35
    %p44 = scmp.eq.s32.totalorder %s13, 1
    %p45 = por %p43, %p44
    %p46 = scmp.ne.s32.totalorder %s35, %s36
    %p47 = scmp.eq.s32.totalorder %s13, 0
    %p48 = por %p46, %p47
    %p49 = scmp.ne.s32.totalorder %s35, %s36
    %p50 = scmp.eq.s32.totalorder %s14, 1
    %p51 = por %p49, %p50
    %p53 = scmp.ne.s32.totalorder %s36, %s52
    %p54 = scmp.eq.s32.totalorder %s14, 0
    %p55 = por %p53, %p54
    %s56 = ssub.s32 %s16, %s23
    %p57 = scmp.eq.s32.totalorder %s56, 0
    %s59 = sadd.s32 %s58, 1
    %s60 = scalar_select %p57, %s58, %s59
    %p63 = pneg %p57
    %p64 = scmp.eq.s32.totalorder %s8, 1
    %p65 = por %p63, %p64
    %p66 = scmp.ne.s32.totalorder %s58, %s61
    %p67 = scmp.eq.s32.totalorder %s8, 0
    %p68 = por %p66, %p67
    %p69 = scmp.ne.s32.totalorder %s58, %s61
    %p70 = scmp.eq.s32.totalorder %s13, 1
    %p71 = por %p69, %p70
    %p72 = scmp.ne.s32.totalorder %s61, %s62
    %p73 = scmp.eq.s32.totalorder %s13, 0
    %p74 = por %p72, %p73
    %p75 = scmp.ne.s32.totalorder %s61, %s62
    %p76 = scmp.eq.s32.totalorder %s14, 1
    %p77 = por %p75, %p76
    %p79 = scmp.ne.s32.totalorder %s62, %s78
    %p80 = scmp.eq.s32.totalorder %s14, 0
    %p81 = por %p79, %p80
    %s82 = ssub.s32 %s15, %s27
    %s83 = ssub.s32 %s16, %s23
    %s84 = sor.u32 %s82, %s83
    %p85 = scmp.eq.s32.totalorder %s84, 0
    %s87 = sadd.s32 %s86, 1
    %s88 = scalar_select %p85, %s86, %s87
    %p91 = pneg %p85
    %p92 = scmp.eq.s32.totalorder %s8, 1
    %p93 = por %p91, %p92
    %p94 = scmp.ne.s32.totalorder %s86, %s89
    %p95 = scmp.eq.s32.totalorder %s8, 0
    %p96 = por %p94, %p95
    %p97 = scmp.ne.s32.totalorder %s86, %s89
    %p98 = scmp.eq.s32.totalorder %s13, 1
    %p99 = por %p97, %p98
    %p100 = scmp.ne.s32.totalorder %s89, %s90
    %p101 = scmp.eq.s32.totalorder %s13, 0
    %p102 = por %p100, %p101
    %p103 = scmp.ne.s32.totalorder %s89, %s90
    %p104 = scmp.eq.s32.totalorder %s14, 1
    %p105 = por %p103, %p104
    %p107 = scmp.ne.s32.totalorder %s90, %s106
    %p108 = scmp.eq.s32.totalorder %s14, 0
    %p109 = por %p107, %p108
    %p110 = scmp.le.s32.totalorder 1, %s8
    %p111 = scmp.lt.s32.totalorder %s8, 3
    %p112 = pnand %p110, %p111
    %p113 = pneg %p112
    // Predicated region
    $region9: #{base_model_forward.7} parent=5 // pred_check
      _
    $region10: #{base_model_forward.7} parent=5 // pred_check_branch
      %115 = sbr.rel (%p112) target = $region12
    $region11: #{base_model_forward.7} parent=5 // pred_region
      %s116 = ssub.s32 %s8, 1
      // Predicated region
      $region13: #{base_model_forward.7} parent=11 // pred_check
        %p117 = pneg %p74
      $region14: #{base_model_forward.7} parent=11 // pred_check_branch
        %119 = sbr.rel (%p117) target = $region16
      $region15: #{base_model_forward.7} parent=11 // pred_region
        %s120 = smul.u32 16, %s18
        %p121 = scmp.lt.s32.totalorder %s120, 15
        %s122 = scalar_select %p121, %s120, 15
        %s123 = smul.addr %s122, 8
        %s124 = scalar_lea.vmem %s1, %s123
        %s125 = smul.u32 16, %s18
      $region16: #{base_model_forward.7} parent=11 // pred_fallthru
        _
    $region12: #{base_model_forward.7} parent=5 // pred_fallthru
      _
    %p126 = scmp.lt.s32.totalorder %s8, 2
    // Predicated region
    $region17: #{base_model_forward.7} parent=5 // pred_check
      %p127 = pneg %p126
    $region18: #{base_model_forward.7} parent=5 // pred_check_branch
      %129 = sbr.rel (%p127) target = $region20
    $region19: #{base_model_forward.7} parent=5 // pred_region
      // Predicated region
      $region21: #{base_model_forward.7} parent=19 // pred_check
        %p130 = pneg %p42
      $region22: #{base_model_forward.7} parent=19 // pred_check_branch
        %132 = sbr.rel (%p130) target = $region24
      $region23: #{base_model_forward.7} parent=19 // pred_region
        %s133 = smul.u32 16, %s16
        %p134 = scmp.lt.s32.totalorder %s15, 1
        %s135 = scalar_select %p134, %s15, 1
        %p136 = scmp.lt.s32.totalorder %s133, 15
        %s137 = scalar_select %p136, %s133, 15
        %s138 = smul.addr %s135, 16
        %s139 = sadd.s32 %s137, %s138
        %s140 = smul.addr %s139, 8
        %s141 = scalar_lea.vmem %s0, %s140
        %s142 = smul.u32 16, %s16
      $region24: #{base_model_forward.7} parent=19 // pred_fallthru
        _
    $region20: #{base_model_forward.7} parent=5 // pred_fallthru
      _
    %p143 = scmp.le.s32.totalorder 1, %s8
    %p144 = scmp.lt.s32.totalorder %s8, 3
    %p145 = pnand %p143, %p144
    %p146 = pneg %p145
    // Predicated region
    $region25: #{base_model_forward.7} parent=5 // pred_check
      _
    $region26: #{base_model_forward.7} parent=5 // pred_check_branch
      %148 = sbr.rel (%p145) target = $region28
    $region27: #{base_model_forward.7} parent=5 // pred_region
      %s149 = ssub.s32 %s8, 1
      %s150 = smul.u32 16, %s18
      %p151 = scmp.lt.s32.totalorder %s17, 1
      %s152 = scalar_select %p151, %s17, 1
      %p153 = scmp.lt.s32.totalorder %s150, 15
      %s154 = scalar_select %p153, %s150, 15
      %s155 = smul.addr %s152, 16
      %s156 = sadd.s32 %s154, %s155
      %s157 = smul.addr %s156, 8
      %s158 = scalar_lea.vmem %s0, %s157
      %p159 = pneg %p48
      %p160 = pneg %p45
      %s161 = smul.u32 16, %s18
      %p162 = scmp.lt.s32.totalorder %s161, 15
      %s163 = scalar_select %p162, %s161, 15
      %s164 = smul.addr %s163, 8
      %s165 = scalar_lea.vmem %s1, %s164
      %p166 = pneg %p74
      %p167 = pneg %p71
      %p168 = pneg %p102
      %p169 = pneg %p99
      %s170 = smul.u32 16, %s18
      %p171 = scmp.lt.s32.totalorder %s17, 1
      %s172 = scalar_select %p171, %s17, 1
      %p173 = scmp.lt.s32.totalorder %s170, 15
      %s174 = scalar_select %p173, %s170, 15
      %s175 = smul.addr %s172, 16
      %s176 = sadd.s32 %s174, %s175
      %s177 = smul.addr %s176, 8
      %s178 = scalar_lea.vmem %s2, %s177
      %s179 = smul.u32 16, %s18
      %p180 = scmp.lt.s32.totalorder %s17, 1
      %s181 = scalar_select %p180, %s17, 1
      %p182 = scmp.lt.s32.totalorder %s179, 15
      %s183 = scalar_select %p182, %s179, 15
      %s184 = smul.addr %s181, 16
      %s185 = sadd.s32 %s183, %s184
      %s186 = smul.addr %s185, 8
      %s187 = scalar_lea.vmem %s0, %s186
      %s188 = smul.u32 16, %s18
      %s189 = smul.u32 16, %s18
      %p190 = scmp.lt.s32.totalorder %s189, 15
      %s191 = scalar_select %p190, %s189, 15
      %s192 = smul.addr %s191, 8
      %s193 = scalar_lea.vmem %s1, %s192
      %s194 = smul.u32 16, %s18
      %s195 = smul.u32 16, %s18
      %p196 = scmp.lt.s32.totalorder %s17, 1
      %s197 = scalar_select %p196, %s17, 1
      %p198 = scmp.lt.s32.totalorder %s195, 15
      %s199 = scalar_select %p198, %s195, 15
      %s200 = smul.addr %s197, 16
      %s201 = sadd.s32 %s199, %s200
      %s202 = smul.addr %s201, 8
      %s203 = scalar_lea.vmem %s2, %s202
      %s204 = smul.u32 16, %s18
      %v205 = vld [vmem:[%s187] sm:$0xff]
      %v206 = vld [vmem:[%s187 + $0x8] sm:$0xff]
      %v207 = vld [vmem:[%s187 + $0x10] sm:$0xff]
      %v208 = vld [vmem:[%s187 + $0x18] sm:$0xff]
      %v209 = vld [vmem:[%s187 + $0x20] sm:$0xff]
      %v210 = vld [vmem:[%s187 + $0x28] sm:$0xff]
      %v211 = vld [vmem:[%s187 + $0x30] sm:$0xff]
      %v212 = vld [vmem:[%s187 + $0x38] sm:$0xff]
      %v213 = vld [vmem:[%s187 + $0x40] sm:$0xff]
      %v214 = vld [vmem:[%s187 + $0x48] sm:$0xff]
      %v215 = vld [vmem:[%s187 + $0x50] sm:$0xff]
      %v216 = vld [vmem:[%s187 + $0x58] sm:$0xff]
      %v217 = vld [vmem:[%s187 + $0x60] sm:$0xff]
      %v218 = vld [vmem:[%s187 + $0x68] sm:$0xff]
      %v219 = vld [vmem:[%s187 + $0x70] sm:$0xff]
      %v220 = vld [vmem:[%s187 + $0x78] sm:$0xff]
      %v221 = vld [vmem:[%s193] sm:$0xff]
      %v222 = vld [vmem:[%s193 + $0x8] sm:$0xff]
      %v223 = vld [vmem:[%s193 + $0x10] sm:$0xff]
      %v224 = vld [vmem:[%s193 + $0x18] sm:$0xff]
      %v225 = vld [vmem:[%s193 + $0x20] sm:$0xff]
      %v226 = vld [vmem:[%s193 + $0x28] sm:$0xff]
      %v227 = vld [vmem:[%s193 + $0x30] sm:$0xff]
      %v228 = vld [vmem:[%s193 + $0x38] sm:$0xff]
      %v229 = vld [vmem:[%s193 + $0x40] sm:$0xff]
      %v230 = vld [vmem:[%s193 + $0x48] sm:$0xff]
      %v231 = vld [vmem:[%s193 + $0x50] sm:$0xff]
      %v232 = vld [vmem:[%s193 + $0x58] sm:$0xff]
      %v233 = vld [vmem:[%s193 + $0x60] sm:$0xff]
      %v234 = vld [vmem:[%s193 + $0x68] sm:$0xff]
      %v235 = vld [vmem:[%s193 + $0x70] sm:$0xff]
      %v236 = vld [vmem:[%s193 + $0x78] sm:$0xff]
      %238 = vset.pattern.permute.xlu0 0
      %239 = vperm.xlu0 %238, %v221
      %v240 = vpop.permute.xlu0 %239
      %243 = vset.pattern.permute.xlu0 0
      %244 = vperm.xlu0 %243, %v222
      %v245 = vpop.permute.xlu0 %244
      %248 = vset.pattern.permute.xlu0 0
      %249 = vperm.xlu0 %248, %v223
      %v250 = vpop.permute.xlu0 %249
      %253 = vset.pattern.permute.xlu0 0
      %254 = vperm.xlu0 %253, %v224
      %v255 = vpop.permute.xlu0 %254
      %258 = vset.pattern.permute.xlu0 0
      %259 = vperm.xlu0 %258, %v225
      %v260 = vpop.permute.xlu0 %259
      %263 = vset.pattern.permute.xlu0 0
      %264 = vperm.xlu0 %263, %v226
      %v265 = vpop.permute.xlu0 %264
      %268 = vset.pattern.permute.xlu0 0
      %269 = vperm.xlu0 %268, %v227
      %v270 = vpop.permute.xlu0 %269
      %273 = vset.pattern.permute.xlu0 0
      %274 = vperm.xlu0 %273, %v228
      %v275 = vpop.permute.xlu0 %274
      %278 = vset.pattern.permute.xlu0 0
      %279 = vperm.xlu0 %278, %v229
      %v280 = vpop.permute.xlu0 %279
      %283 = vset.pattern.permute.xlu0 0
      %284 = vperm.xlu0 %283, %v230
      %v285 = vpop.permute.xlu0 %284
      %288 = vset.pattern.permute.xlu0 0
      %289 = vperm.xlu0 %288, %v231
      %v290 = vpop.permute.xlu0 %289
      %293 = vset.pattern.permute.xlu0 0
      %294 = vperm.xlu0 %293, %v232
      %v295 = vpop.permute.xlu0 %294
      %298 = vset.pattern.permute.xlu0 0
      %299 = vperm.xlu0 %298, %v233
      %v300 = vpop.permute.xlu0 %299
      %303 = vset.pattern.permute.xlu0 0
      %304 = vperm.xlu0 %303, %v234
      %v305 = vpop.permute.xlu0 %304
      %308 = vset.pattern.permute.xlu0 0
      %309 = vperm.xlu0 %308, %v235
      %v310 = vpop.permute.xlu0 %309
      %313 = vset.pattern.permute.xlu0 0
      %314 = vperm.xlu0 %313, %v236
      %v315 = vpop.permute.xlu0 %314
      %v317 = vadd.f32 %v205, %v240
      %v318 = vadd.f32 %v206, %v245
      %v319 = vadd.f32 %v207, %v250
      %v320 = vadd.f32 %v208, %v255
      %v321 = vadd.f32 %v209, %v260
      %v322 = vadd.f32 %v210, %v265
      %v323 = vadd.f32 %v211, %v270
      %v324 = vadd.f32 %v212, %v275
      %v325 = vadd.f32 %v213, %v280
      %v326 = vadd.f32 %v214, %v285
      %v327 = vadd.f32 %v215, %v290
      %v328 = vadd.f32 %v216, %v295
      %v329 = vadd.f32 %v217, %v300
      %v330 = vadd.f32 %v218, %v305
      %v331 = vadd.f32 %v219, %v310
      %v332 = vadd.f32 %v220, %v315
      %v333 = vmin.f32 %v317, 20.0
      %v334 = vmin.f32 %v318, 20.0
      %v335 = vmin.f32 %v319, 20.0
      %v336 = vmin.f32 %v320, 20.0
      %v337 = vmin.f32 %v321, 20.0
      %v338 = vmin.f32 %v322, 20.0
      %v339 = vmin.f32 %v323, 20.0
      %v340 = vmin.f32 %v324, 20.0
      %v341 = vmin.f32 %v325, 20.0
      %v342 = vmin.f32 %v326, 20.0
      %v343 = vmin.f32 %v327, 20.0
      %v344 = vmin.f32 %v328, 20.0
      %v345 = vmin.f32 %v329, 20.0
      %v346 = vmin.f32 %v330, 20.0
      %v347 = vmin.f32 %v331, 20.0
      %v348 = vmin.f32 %v332, 20.0
      %v349 = vmul.f32 %v333, 1.442695
      %v350 = vpow.pop %v349
      %v351 = vmul.f32 %v334, 1.442695
      %v352 = vpow.pop %v351
      %v353 = vmul.f32 %v335, 1.442695
      %v354 = vpow.pop %v353
      %v355 = vmul.f32 %v336, 1.442695
      %v356 = vpow.pop %v355
      %v357 = vmul.f32 %v337, 1.442695
      %v358 = vpow.pop %v357
      %v359 = vmul.f32 %v338, 1.442695
      %v360 = vpow.pop %v359
      %v361 = vmul.f32 %v339, 1.442695
      %v362 = vpow.pop %v361
      %v363 = vmul.f32 %v340, 1.442695
      %v364 = vpow.pop %v363
      %v365 = vmul.f32 %v341, 1.442695
      %v366 = vpow.pop %v365
      %v367 = vmul.f32 %v342, 1.442695
      %v368 = vpow.pop %v367
      %v369 = vmul.f32 %v343, 1.442695
      %v370 = vpow.pop %v369
      %v371 = vmul.f32 %v344, 1.442695
      %v372 = vpow.pop %v371
      %v373 = vmul.f32 %v345, 1.442695
      %v374 = vpow.pop %v373
      %v375 = vmul.f32 %v346, 1.442695
      %v376 = vpow.pop %v375
      %v377 = vmul.f32 %v347, 1.442695
      %v378 = vpow.pop %v377
      %v379 = vmul.f32 %v348, 1.442695
      %v380 = vpow.pop %v379
      %v381 = vadd.f32 %v350, 2.0
      %v382 = vadd.f32 %v352, 2.0
      %v383 = vadd.f32 %v354, 2.0
      %v384 = vadd.f32 %v356, 2.0
      %v385 = vadd.f32 %v358, 2.0
      %v386 = vadd.f32 %v360, 2.0
      %v387 = vadd.f32 %v362, 2.0
      %v388 = vadd.f32 %v364, 2.0
      %v389 = vadd.f32 %v366, 2.0
      %v390 = vadd.f32 %v368, 2.0
      %v391 = vadd.f32 %v370, 2.0
      %v392 = vadd.f32 %v372, 2.0
      %v393 = vadd.f32 %v374, 2.0
      %v394 = vadd.f32 %v376, 2.0
      %v395 = vadd.f32 %v378, 2.0
      %v396 = vadd.f32 %v380, 2.0
      %v397 = vmul.f32 %v350, %v381
      %v398 = vmul.f32 %v352, %v382
      %v399 = vmul.f32 %v354, %v383
      %v400 = vmul.f32 %v356, %v384
      %v401 = vmul.f32 %v358, %v385
      %v402 = vmul.f32 %v360, %v386
      %v403 = vmul.f32 %v362, %v387
      %v404 = vmul.f32 %v364, %v388
      %v405 = vmul.f32 %v366, %v389
      %v406 = vmul.f32 %v368, %v390
      %v407 = vmul.f32 %v370, %v391
      %v408 = vmul.f32 %v372, %v392
      %v409 = vmul.f32 %v374, %v393
      %v410 = vmul.f32 %v376, %v394
      %v411 = vmul.f32 %v378, %v395
      %v412 = vmul.f32 %v380, %v396
      %vm413 = vcmp.gt.f32.partialorder %v317, 20.0
      %vm414 = vcmp.gt.f32.partialorder %v318, 20.0
      %vm415 = vcmp.gt.f32.partialorder %v319, 20.0
      %vm416 = vcmp.gt.f32.partialorder %v320, 20.0
      %vm417 = vcmp.gt.f32.partialorder %v321, 20.0
      %vm418 = vcmp.gt.f32.partialorder %v322, 20.0
      %vm419 = vcmp.gt.f32.partialorder %v323, 20.0
      %vm420 = vcmp.gt.f32.partialorder %v324, 20.0
      %vm421 = vcmp.gt.f32.partialorder %v325, 20.0
      %vm422 = vcmp.gt.f32.partialorder %v326, 20.0
      %vm423 = vcmp.gt.f32.partialorder %v327, 20.0
      %vm424 = vcmp.gt.f32.partialorder %v328, 20.0
      %vm425 = vcmp.gt.f32.partialorder %v329, 20.0
      %vm426 = vcmp.gt.f32.partialorder %v330, 20.0
      %vm427 = vcmp.gt.f32.partialorder %v331, 20.0
      %vm428 = vcmp.gt.f32.partialorder %v332, 20.0
      %v429 = vadd.f32 %v397, 2.0
      %v430 = vadd.f32 %v398, 2.0
      %v431 = vadd.f32 %v399, 2.0
      %v432 = vadd.f32 %v400, 2.0
      %v433 = vadd.f32 %v401, 2.0
      %v434 = vadd.f32 %v402, 2.0
      %v435 = vadd.f32 %v403, 2.0
      %v436 = vadd.f32 %v404, 2.0
      %v437 = vadd.f32 %v405, 2.0
      %v438 = vadd.f32 %v406, 2.0
      %v439 = vadd.f32 %v407, 2.0
      %v440 = vadd.f32 %v408, 2.0
      %v441 = vadd.f32 %v409, 2.0
      %v442 = vadd.f32 %v410, 2.0
      %v443 = vadd.f32 %v411, 2.0
      %v444 = vadd.f32 %v412, 2.0
      %v445 = vrcp.pop %v429
      %v446 = vmul.f32 %v397, %v445
      %v447 = vrcp.pop %v430
      %v448 = vmul.f32 %v398, %v447
      %v449 = vrcp.pop %v431
      %v450 = vmul.f32 %v399, %v449
      %v451 = vrcp.pop %v432
      %v452 = vmul.f32 %v400, %v451
      %v453 = vrcp.pop %v433
      %v454 = vmul.f32 %v401, %v453
      %v455 = vrcp.pop %v434
      %v456 = vmul.f32 %v402, %v455
      %v457 = vrcp.pop %v435
      %v458 = vmul.f32 %v403, %v457
      %v459 = vrcp.pop %v436
      %v460 = vmul.f32 %v404, %v459
      %v461 = vrcp.pop %v437
      %v462 = vmul.f32 %v405, %v461
      %v463 = vrcp.pop %v438
      %v464 = vmul.f32 %v406, %v463
      %v465 = vrcp.pop %v439
      %v466 = vmul.f32 %v407, %v465
      %v467 = vrcp.pop %v440
      %v468 = vmul.f32 %v408, %v467
      %v469 = vrcp.pop %v441
      %v470 = vmul.f32 %v409, %v469
      %v471 = vrcp.pop %v442
      %v472 = vmul.f32 %v410, %v471
      %v473 = vrcp.pop %v443
      %v474 = vmul.f32 %v411, %v473
      %v475 = vrcp.pop %v444
      %v476 = vmul.f32 %v412, %v475
      %v477 = vmul.f32 %v317, %v446
      %v478 = vmul.f32 %v318, %v448
      %v479 = vmul.f32 %v319, %v450
      %v480 = vmul.f32 %v320, %v452
      %v481 = vmul.f32 %v321, %v454
      %v482 = vmul.f32 %v322, %v456
      %v483 = vmul.f32 %v323, %v458
      %v484 = vmul.f32 %v324, %v460
      %v485 = vmul.f32 %v325, %v462
      %v486 = vmul.f32 %v326, %v464
      %v487 = vmul.f32 %v327, %v466
      %v488 = vmul.f32 %v328, %v468
      %v489 = vmul.f32 %v329, %v470
      %v490 = vmul.f32 %v330, %v472
      %v491 = vmul.f32 %v331, %v474
      %v492 = vmul.f32 %v332, %v476
      %v493 = vsel %vm413, %v317, %v477
      %v494 = vsel %vm414, %v318, %v478
      %v495 = vsel %vm415, %v319, %v479
      %v496 = vsel %vm416, %v320, %v480
      %v497 = vsel %vm417, %v321, %v481
      %v498 = vsel %vm418, %v322, %v482
      %v499 = vsel %vm419, %v323, %v483
      %v500 = vsel %vm420, %v324, %v484
      %v501 = vsel %vm421, %v325, %v485
      %v502 = vsel %vm422, %v326, %v486
      %v503 = vsel %vm423, %v327, %v487
      %v504 = vsel %vm424, %v328, %v488
      %v505 = vsel %vm425, %v329, %v489
      %v506 = vsel %vm426, %v330, %v490
      %v507 = vsel %vm427, %v331, %v491
      %v508 = vsel %vm428, %v332, %v492
      %vm509 = vcmask 72704
      %510 = vst.msk [vmem:[%s203] sm:$0xff] %vm509, %v493
      %511 = vst.msk [vmem:[%s203 + $0x8] sm:$0xff] %vm509, %v494
      %512 = vst.msk [vmem:[%s203 + $0x10] sm:$0xff] %vm509, %v495
      %513 = vst.msk [vmem:[%s203 + $0x18] sm:$0xff] %vm509, %v496
      %514 = vst.msk [vmem:[%s203 + $0x20] sm:$0xff] %vm509, %v497
      %515 = vst.msk [vmem:[%s203 + $0x28] sm:$0xff] %vm509, %v498
      %516 = vst.msk [vmem:[%s203 + $0x30] sm:$0xff] %vm509, %v499
      %517 = vst.msk [vmem:[%s203 + $0x38] sm:$0xff] %vm509, %v500
      %518 = vst.msk [vmem:[%s203 + $0x40] sm:$0xff] %vm509, %v501
      %519 = vst.msk [vmem:[%s203 + $0x48] sm:$0xff] %vm509, %v502
      %520 = vst.msk [vmem:[%s203 + $0x50] sm:$0xff] %vm509, %v503
      %521 = vst.msk [vmem:[%s203 + $0x58] sm:$0xff] %vm509, %v504
      %522 = vst.msk [vmem:[%s203 + $0x60] sm:$0xff] %vm509, %v505
      %523 = vst.msk [vmem:[%s203 + $0x68] sm:$0xff] %vm509, %v506
      %524 = vst.msk [vmem:[%s203 + $0x70] sm:$0xff] %vm509, %v507
      %525 = vst.msk [vmem:[%s203 + $0x78] sm:$0xff] %vm509, %v508
      %s526 = smul.u32 16, %s18
      %p527 = scmp.lt.s32.totalorder %s17, 1
      %s528 = scalar_select %p527, %s17, 1
      %p529 = scmp.lt.s32.totalorder %s526, 15
      %s530 = scalar_select %p529, %s526, 15
      %s531 = smul.addr %s528, 16
      %s532 = sadd.s32 %s530, %s531
      %s533 = smul.addr %s532, 8
      %s534 = scalar_lea.vmem %s2, %s533
      // Predicated region
      $region29: #{base_model_forward.7} parent=27 // pred_check
        %p535 = pneg %p99
      $region30: #{base_model_forward.7} parent=27 // pred_check_branch
        %537 = sbr.rel (%p535) target = $region32
      $region31: #{base_model_forward.7} parent=27 // pred_region
        %s538 = smul.u32 16, %s18
      $region32: #{base_model_forward.7} parent=27 // pred_fallthru
        _
    $region28: #{base_model_forward.7} parent=5 // pred_fallthru
      _
    %p539 = scmp.le.s32.totalorder 2, %s8
    // Predicated region
    $region33: #{base_model_forward.7} parent=5 // pred_check
      %p540 = pneg %p539
    $region34: #{base_model_forward.7} parent=5 // pred_check_branch
      %542 = sbr.rel (%p540) target = $region36
    $region35: #{base_model_forward.7} parent=5 // pred_region
      %s543 = ssub.s32 %s8, 2
      // Predicated region
      $region37: #{base_model_forward.7} parent=35 // pred_check
        %p544 = pneg %p105
      $region38: #{base_model_forward.7} parent=35 // pred_check_branch
        %546 = sbr.rel (%p544) target = $region40
      $region39: #{base_model_forward.7} parent=35 // pred_region
        %s547 = smul.u32 16, %s20
        %p548 = scmp.lt.s32.totalorder %s19, 1
        %s549 = scalar_select %p548, %s19, 1
        %p550 = scmp.lt.s32.totalorder %s547, 15
        %s551 = scalar_select %p550, %s547, 15
        %s552 = smul.addr %s549, 16
        %s553 = sadd.s32 %s551, %s552
        %s554 = smul.addr %s553, 8
        %s555 = scalar_lea.vmem %s2, %s554
      $region40: #{base_model_forward.7} parent=35 // pred_fallthru
        _
    $region36: #{base_model_forward.7} parent=5 // pred_fallthru
      _
  $region6: #{base_model_forward.7} parent=0 // loop_footer
    %s12 = sadd.s32 1, %s8
  $region7: #{base_model_forward.7} parent=0 // loop_footer_branch
    %7 = sbr.rel target = $region3
  $region8: #{base_model_forward.7} parent=0 // loop_exit
    _

// kernel: base_model_forward.8
$region0: #{base_model_forward.8}
  #allocation0 [shape = 'u32[]', space=smem, size = 0x4, offset = 0x4, fixed_abs, tag = 'smem constant byte address 0x4 - core index']
  #allocation1 [shape = 'u32[144,128]{1,0:T(1,128)}', space=vmem, size = 0x12000, scoped, tag = 'internal scratch']
  %s0 = inlined_call_operand.vmem [shape: f32[2,128,5], index: 0, kind: input, shape index: {}]
  %s1 = inlined_call_operand.vmem [shape: f32[128,1], index: 1, kind: input, shape index: {}]
  %s2 = inlined_call_operand.vmem [shape: f32[2,128,5], index: 2, kind: input, shape index: {}]
  %s3 = inlined_call_operand.vmem [shape: f32[2,128,5], index: 3, kind: output, shape index: {}]
  %s4 = sld [smem:[#allocation0]]
  $region45: #{base_model_forward.8} parent=0
    _
  %s6 = ssub.s32 1, %s4
  %s7 = scalar_select 0, %s6, %s4
  loop: start=0, step=1, limit=4
  $region2: #{base_model_forward.8} parent=0 // loop_pre_header
    _
  $region3: #{base_model_forward.8} parent=0 // loop_header
    %s9 = sphi 0, %s13
    %p10 = scmp.ge.s32.totalorder %s9, 4
    %s16 = sphi 0, %s28
    %s17 = sphi 0, %s24
    %s18 = sphi 0, %s16
    %s19 = sphi 0, %s17
    %s20 = sphi 0, %s18
    %s21 = sphi 0, %s19
    %s33 = sphi 0, %s35
    %s36 = sphi 0, %s33
    %s37 = sphi 0, %s36
    %s53 = sphi 0, %s37
    %s59 = sphi 0, %s61
    %s62 = sphi 0, %s59
    %s63 = sphi 0, %s62
    %s79 = sphi 0, %s63
    %s87 = sphi 0, %s89
    %s90 = sphi 0, %s87
    %s91 = sphi 0, %s90
    %s107 = sphi 0, %s91
    %s115 = sphi 0, %s117
    %s118 = sphi 0, %s115
    %s119 = sphi 0, %s118
    %s135 = sphi 0, %s119
  $region4: #{base_model_forward.8} parent=0 // loop_header_branch
    %12 = sbr.rel (%p10) target = $region8
  $region5: #{base_model_forward.8} parent=0 // loop_body
    %s14 = ssub.s32 %s9, 1
    %s15 = ssub.s32 %s9, 2
    %s22 = sadd.s32 1, %s17
    %p23 = scmp.ge.s32.totalorder %s22, 1
    %s24 = scalar_select %p23, 0, %s22
    %s25 = sadd.s32 1, %s16
    %s26 = scalar_select %p23, %s25, %s16
    %p27 = scmp.ge.s32.totalorder %s26, 2
    %s28 = scalar_select %p27, 0, %s26
    %s29 = ssub.s32 %s16, %s28
    %s30 = ssub.s32 %s17, %s24
    %s31 = sor.u32 %s29, %s30
    %p32 = scmp.eq.s32.totalorder %s31, 0
    %s34 = sadd.s32 %s33, 1
    %s35 = scalar_select %p32, %s33, %s34
    %p38 = pneg %p32
    %p39 = scmp.eq.s32.totalorder %s9, 1
    %p40 = por %p38, %p39
    %p41 = scmp.ne.s32.totalorder %s33, %s36
    %p42 = scmp.eq.s32.totalorder %s9, 0
    %p43 = por %p41, %p42
    %p44 = scmp.ne.s32.totalorder %s33, %s36
    %p45 = scmp.eq.s32.totalorder %s14, 1
    %p46 = por %p44, %p45
    %p47 = scmp.ne.s32.totalorder %s36, %s37
    %p48 = scmp.eq.s32.totalorder %s14, 0
    %p49 = por %p47, %p48
    %p50 = scmp.ne.s32.totalorder %s36, %s37
    %p51 = scmp.eq.s32.totalorder %s15, 1
    %p52 = por %p50, %p51
    %p54 = scmp.ne.s32.totalorder %s37, %s53
    %p55 = scmp.eq.s32.totalorder %s15, 0
    %p56 = por %p54, %p55
    %s57 = ssub.s32 %s17, %s24
    %p58 = scmp.eq.s32.totalorder %s57, 0
    %s60 = sadd.s32 %s59, 1
    %s61 = scalar_select %p58, %s59, %s60
    %p64 = pneg %p58
    %p65 = scmp.eq.s32.totalorder %s9, 1
    %p66 = por %p64, %p65
    %p67 = scmp.ne.s32.totalorder %s59, %s62
    %p68 = scmp.eq.s32.totalorder %s9, 0
    %p69 = por %p67, %p68
    %p70 = scmp.ne.s32.totalorder %s59, %s62
    %p71 = scmp.eq.s32.totalorder %s14, 1
    %p72 = por %p70, %p71
    %p73 = scmp.ne.s32.totalorder %s62, %s63
    %p74 = scmp.eq.s32.totalorder %s14, 0
    %p75 = por %p73, %p74
    %p76 = scmp.ne.s32.totalorder %s62, %s63
    %p77 = scmp.eq.s32.totalorder %s15, 1
    %p78 = por %p76, %p77
    %p80 = scmp.ne.s32.totalorder %s63, %s79
    %p81 = scmp.eq.s32.totalorder %s15, 0
    %p82 = por %p80, %p81
    %s83 = ssub.s32 %s16, %s28
    %s84 = ssub.s32 %s17, %s24
    %s85 = sor.u32 %s83, %s84
    %p86 = scmp.eq.s32.totalorder %s85, 0
    %s88 = sadd.s32 %s87, 1
    %s89 = scalar_select %p86, %s87, %s88
    %p92 = pneg %p86
    %p93 = scmp.eq.s32.totalorder %s9, 1
    %p94 = por %p92, %p93
    %p95 = scmp.ne.s32.totalorder %s87, %s90
    %p96 = scmp.eq.s32.totalorder %s9, 0
    %p97 = por %p95, %p96
    %p98 = scmp.ne.s32.totalorder %s87, %s90
    %p99 = scmp.eq.s32.totalorder %s14, 1
    %p100 = por %p98, %p99
    %p101 = scmp.ne.s32.totalorder %s90, %s91
    %p102 = scmp.eq.s32.totalorder %s14, 0
    %p103 = por %p101, %p102
    %p104 = scmp.ne.s32.totalorder %s90, %s91
    %p105 = scmp.eq.s32.totalorder %s15, 1
    %p106 = por %p104, %p105
    %p108 = scmp.ne.s32.totalorder %s91, %s107
    %p109 = scmp.eq.s32.totalorder %s15, 0
    %p110 = por %p108, %p109
    %s111 = ssub.s32 %s16, %s28
    %s112 = ssub.s32 %s17, %s24
    %s113 = sor.u32 %s111, %s112
    %p114 = scmp.eq.s32.totalorder %s113, 0
    %s116 = sadd.s32 %s115, 1
    %s117 = scalar_select %p114, %s115, %s116
    %p120 = pneg %p114
    %p121 = scmp.eq.s32.totalorder %s9, 1
    %p122 = por %p120, %p121
    %p123 = scmp.ne.s32.totalorder %s115, %s118
    %p124 = scmp.eq.s32.totalorder %s9, 0
    %p125 = por %p123, %p124
    %p126 = scmp.ne.s32.totalorder %s115, %s118
    %p127 = scmp.eq.s32.totalorder %s14, 1
    %p128 = por %p126, %p127
    %p129 = scmp.ne.s32.totalorder %s118, %s119
    %p130 = scmp.eq.s32.totalorder %s14, 0
    %p131 = por %p129, %p130
    %p132 = scmp.ne.s32.totalorder %s118, %s119
    %p133 = scmp.eq.s32.totalorder %s15, 1
    %p134 = por %p132, %p133
    %p136 = scmp.ne.s32.totalorder %s119, %s135
    %p137 = scmp.eq.s32.totalorder %s15, 0
    %p138 = por %p136, %p137
    %p139 = scmp.le.s32.totalorder 1, %s9
    %p140 = scmp.lt.s32.totalorder %s9, 3
    %p141 = pnand %p139, %p140
    %p142 = pneg %p141
    // Predicated region
    $region9: #{base_model_forward.8} parent=5 // pred_check
      _
    $region10: #{base_model_forward.8} parent=5 // pred_check_branch
      %144 = sbr.rel (%p141) target = $region12
    $region11: #{base_model_forward.8} parent=5 // pred_region
      %s145 = ssub.s32 %s9, 1
      // Predicated region
      $region13: #{base_model_forward.8} parent=11 // pred_check
        %p146 = pneg %p75
      $region14: #{base_model_forward.8} parent=11 // pred_check_branch
        %148 = sbr.rel (%p146) target = $region16
      $region15: #{base_model_forward.8} parent=11 // pred_region
        %s149 = smul.u32 16, %s19
        %p150 = scmp.lt.s32.totalorder %s149, 15
        %s151 = scalar_select %p150, %s149, 15
        %s152 = smul.addr %s151, 8
        %s153 = scalar_lea.vmem %s1, %s152
        %s154 = smul.u32 16, %s19
      $region16: #{base_model_forward.8} parent=11 // pred_fallthru
        _
    $region12: #{base_model_forward.8} parent=5 // pred_fallthru
      _
    %p155 = scmp.lt.s32.totalorder %s9, 2
    // Predicated region
    $region17: #{base_model_forward.8} parent=5 // pred_check
      %p156 = pneg %p155
    $region18: #{base_model_forward.8} parent=5 // pred_check_branch
      %158 = sbr.rel (%p156) target = $region20
    $region19: #{base_model_forward.8} parent=5 // pred_region
      // Predicated region
      $region21: #{base_model_forward.8} parent=19 // pred_check
        %p159 = pneg %p43
      $region22: #{base_model_forward.8} parent=19 // pred_check_branch
        %161 = sbr.rel (%p159) target = $region24
      $region23: #{base_model_forward.8} parent=19 // pred_region
        %s162 = smul.u32 16, %s17
        %p163 = scmp.lt.s32.totalorder %s16, 1
        %s164 = scalar_select %p163, %s16, 1
        %p165 = scmp.lt.s32.totalorder %s162, 15
        %s166 = scalar_select %p165, %s162, 15
        %s167 = smul.addr %s164, 16
        %s168 = sadd.s32 %s166, %s167
        %s169 = smul.addr %s168, 8
        %s170 = scalar_lea.vmem %s0, %s169
        %s171 = smul.u32 16, %s17
      $region24: #{base_model_forward.8} parent=19 // pred_fallthru
        _
      // Predicated region
      $region25: #{base_model_forward.8} parent=19 // pred_check
        %p172 = pneg %p97
      $region26: #{base_model_forward.8} parent=19 // pred_check_branch
        %174 = sbr.rel (%p172) target = $region28
      $region27: #{base_model_forward.8} parent=19 // pred_region
        %s175 = smul.u32 16, %s17
        %p176 = scmp.lt.s32.totalorder %s16, 1
        %s177 = scalar_select %p176, %s16, 1
        %p178 = scmp.lt.s32.totalorder %s175, 15
        %s179 = scalar_select %p178, %s175, 15
        %s180 = smul.addr %s177, 16
        %s181 = sadd.s32 %s179, %s180
        %s182 = smul.addr %s181, 8
        %s183 = scalar_lea.vmem %s2, %s182
        %s184 = smul.u32 16, %s17
      $region28: #{base_model_forward.8} parent=19 // pred_fallthru
        _
    $region20: #{base_model_forward.8} parent=5 // pred_fallthru
      _
    %p185 = scmp.le.s32.totalorder 1, %s9
    %p186 = scmp.lt.s32.totalorder %s9, 3
    %p187 = pnand %p185, %p186
    %p188 = pneg %p187
    // Predicated region
    $region29: #{base_model_forward.8} parent=5 // pred_check
      _
    $region30: #{base_model_forward.8} parent=5 // pred_check_branch
      %190 = sbr.rel (%p187) target = $region32
    $region31: #{base_model_forward.8} parent=5 // pred_region
      %s191 = ssub.s32 %s9, 1
      %s192 = smul.u32 16, %s19
      %p193 = scmp.lt.s32.totalorder %s18, 1
      %s194 = scalar_select %p193, %s18, 1
      %p195 = scmp.lt.s32.totalorder %s192, 15
      %s196 = scalar_select %p195, %s192, 15
      %s197 = smul.addr %s194, 16
      %s198 = sadd.s32 %s196, %s197
      %s199 = smul.addr %s198, 8
      %s200 = scalar_lea.vmem %s0, %s199
      %p201 = pneg %p49
      %p202 = pneg %p46
      %s203 = smul.u32 16, %s19
      %p204 = scmp.lt.s32.totalorder %s203, 15
      %s205 = scalar_select %p204, %s203, 15
      %s206 = smul.addr %s205, 8
      %s207 = scalar_lea.vmem %s1, %s206
      %p208 = pneg %p75
      %p209 = pneg %p72
      %s210 = smul.u32 16, %s19
      %p211 = scmp.lt.s32.totalorder %s18, 1
      %s212 = scalar_select %p211, %s18, 1
      %p213 = scmp.lt.s32.totalorder %s210, 15
      %s214 = scalar_select %p213, %s210, 15
      %s215 = smul.addr %s212, 16
      %s216 = sadd.s32 %s214, %s215
      %s217 = smul.addr %s216, 8
      %s218 = scalar_lea.vmem %s2, %s217
      %p219 = pneg %p103
      %p220 = pneg %p100
      %p221 = pneg %p131
      %p222 = pneg %p128
      %s223 = smul.u32 16, %s19
      %p224 = scmp.lt.s32.totalorder %s18, 1
      %s225 = scalar_select %p224, %s18, 1
      %p226 = scmp.lt.s32.totalorder %s223, 15
      %s227 = scalar_select %p226, %s223, 15
      %s228 = smul.addr %s225, 16
      %s229 = sadd.s32 %s227, %s228
      %s230 = smul.addr %s229, 8
      %s231 = scalar_lea.vmem %s3, %s230
      %s232 = smul.u32 16, %s19
      %p233 = scmp.lt.s32.totalorder %s18, 1
      %s234 = scalar_select %p233, %s18, 1
      %p235 = scmp.lt.s32.totalorder %s232, 15
      %s236 = scalar_select %p235, %s232, 15
      %s237 = smul.addr %s234, 16
      %s238 = sadd.s32 %s236, %s237
      %s239 = smul.addr %s238, 8
      %s240 = scalar_lea.vmem %s0, %s239
      %s241 = smul.u32 16, %s19
      %s242 = smul.u32 16, %s19
      %p243 = scmp.lt.s32.totalorder %s242, 15
      %s244 = scalar_select %p243, %s242, 15
      %s245 = smul.addr %s244, 8
      %s246 = scalar_lea.vmem %s1, %s245
      %s247 = smul.u32 16, %s19
      %s248 = smul.u32 16, %s19
      %p249 = scmp.lt.s32.totalorder %s18, 1
      %s250 = scalar_select %p249, %s18, 1
      %p251 = scmp.lt.s32.totalorder %s248, 15
      %s252 = scalar_select %p251, %s248, 15
      %s253 = smul.addr %s250, 16
      %s254 = sadd.s32 %s252, %s253
      %s255 = smul.addr %s254, 8
      %s256 = scalar_lea.vmem %s2, %s255
      %s257 = smul.u32 16, %s19
      %s258 = smul.u32 16, %s19
      %p259 = scmp.lt.s32.totalorder %s18, 1
      %s260 = scalar_select %p259, %s18, 1
      %p261 = scmp.lt.s32.totalorder %s258, 15
      %s262 = scalar_select %p261, %s258, 15
      %s263 = smul.addr %s260, 16
      %s264 = sadd.s32 %s262, %s263
      %s265 = smul.addr %s264, 8
      %s266 = scalar_lea.vmem %s3, %s265
      %s267 = smul.u32 16, %s19
      %v268 = vld [vmem:[%s240] sm:$0xff]
      %v269 = vld [vmem:[%s240 + $0x8] sm:$0xff]
      %v270 = vld [vmem:[%s240 + $0x10] sm:$0xff]
      %v271 = vld [vmem:[%s240 + $0x18] sm:$0xff]
      %v272 = vld [vmem:[%s240 + $0x20] sm:$0xff]
      %v273 = vld [vmem:[%s240 + $0x28] sm:$0xff]
      %v274 = vld [vmem:[%s240 + $0x30] sm:$0xff]
      %v275 = vld [vmem:[%s240 + $0x38] sm:$0xff]
      %v276 = vld [vmem:[%s240 + $0x40] sm:$0xff]
      %v277 = vld [vmem:[%s240 + $0x48] sm:$0xff]
      %v278 = vld [vmem:[%s240 + $0x50] sm:$0xff]
      %v279 = vld [vmem:[%s240 + $0x58] sm:$0xff]
      %v280 = vld [vmem:[%s240 + $0x60] sm:$0xff]
      %v281 = vld [vmem:[%s240 + $0x68] sm:$0xff]
      %v282 = vld [vmem:[%s240 + $0x70] sm:$0xff]
      %v283 = vld [vmem:[%s240 + $0x78] sm:$0xff]
      %v284 = vld [vmem:[%s246] sm:$0xff]
      %v285 = vld [vmem:[%s246 + $0x8] sm:$0xff]
      %v286 = vld [vmem:[%s246 + $0x10] sm:$0xff]
      %v287 = vld [vmem:[%s246 + $0x18] sm:$0xff]
      %v288 = vld [vmem:[%s246 + $0x20] sm:$0xff]
      %v289 = vld [vmem:[%s246 + $0x28] sm:$0xff]
      %v290 = vld [vmem:[%s246 + $0x30] sm:$0xff]
      %v291 = vld [vmem:[%s246 + $0x38] sm:$0xff]
      %v292 = vld [vmem:[%s246 + $0x40] sm:$0xff]
      %v293 = vld [vmem:[%s246 + $0x48] sm:$0xff]
      %v294 = vld [vmem:[%s246 + $0x50] sm:$0xff]
      %v295 = vld [vmem:[%s246 + $0x58] sm:$0xff]
      %v296 = vld [vmem:[%s246 + $0x60] sm:$0xff]
      %v297 = vld [vmem:[%s246 + $0x68] sm:$0xff]
      %v298 = vld [vmem:[%s246 + $0x70] sm:$0xff]
      %v299 = vld [vmem:[%s246 + $0x78] sm:$0xff]
      %301 = vset.pattern.permute.xlu0 0
      %302 = vperm.xlu0 %301, %v284
      %v303 = vpop.permute.xlu0 %302
      %306 = vset.pattern.permute.xlu0 0
      %307 = vperm.xlu0 %306, %v285
      %v308 = vpop.permute.xlu0 %307
      %311 = vset.pattern.permute.xlu0 0
      %312 = vperm.xlu0 %311, %v286
      %v313 = vpop.permute.xlu0 %312
      %316 = vset.pattern.permute.xlu0 0
      %317 = vperm.xlu0 %316, %v287
      %v318 = vpop.permute.xlu0 %317
      %321 = vset.pattern.permute.xlu0 0
      %322 = vperm.xlu0 %321, %v288
      %v323 = vpop.permute.xlu0 %322
      %326 = vset.pattern.permute.xlu0 0
      %327 = vperm.xlu0 %326, %v289
      %v328 = vpop.permute.xlu0 %327
      %331 = vset.pattern.permute.xlu0 0
      %332 = vperm.xlu0 %331, %v290
      %v333 = vpop.permute.xlu0 %332
      %336 = vset.pattern.permute.xlu0 0
      %337 = vperm.xlu0 %336, %v291
      %v338 = vpop.permute.xlu0 %337
      %341 = vset.pattern.permute.xlu0 0
      %342 = vperm.xlu0 %341, %v292
      %v343 = vpop.permute.xlu0 %342
      %346 = vset.pattern.permute.xlu0 0
      %347 = vperm.xlu0 %346, %v293
      %v348 = vpop.permute.xlu0 %347
      %351 = vset.pattern.permute.xlu0 0
      %352 = vperm.xlu0 %351, %v294
      %v353 = vpop.permute.xlu0 %352
      %356 = vset.pattern.permute.xlu0 0
      %357 = vperm.xlu0 %356, %v295
      %v358 = vpop.permute.xlu0 %357
      %361 = vset.pattern.permute.xlu0 0
      %362 = vperm.xlu0 %361, %v296
      %v363 = vpop.permute.xlu0 %362
      %366 = vset.pattern.permute.xlu0 0
      %367 = vperm.xlu0 %366, %v297
      %v368 = vpop.permute.xlu0 %367
      %371 = vset.pattern.permute.xlu0 0
      %372 = vperm.xlu0 %371, %v298
      %v373 = vpop.permute.xlu0 %372
      %376 = vset.pattern.permute.xlu0 0
      %377 = vperm.xlu0 %376, %v299
      %v378 = vpop.permute.xlu0 %377
      %v380 = vadd.f32 %v268, %v303
      %v381 = vadd.f32 %v269, %v308
      %v382 = vadd.f32 %v270, %v313
      %v383 = vadd.f32 %v271, %v318
      %v384 = vadd.f32 %v272, %v323
      %v385 = vadd.f32 %v273, %v328
      %v386 = vadd.f32 %v274, %v333
      %v387 = vadd.f32 %v275, %v338
      %v388 = vadd.f32 %v276, %v343
      %v389 = vadd.f32 %v277, %v348
      %v390 = vadd.f32 %v278, %v353
      %v391 = vadd.f32 %v279, %v358
      %v392 = vadd.f32 %v280, %v363
      %v393 = vadd.f32 %v281, %v368
      %v394 = vadd.f32 %v282, %v373
      %v395 = vadd.f32 %v283, %v378
      %v396 = vmin.f32 %v380, 20.0
      %v397 = vmin.f32 %v381, 20.0
      %v398 = vmin.f32 %v382, 20.0
      %v399 = vmin.f32 %v383, 20.0
      %v400 = vmin.f32 %v384, 20.0
      %v401 = vmin.f32 %v385, 20.0
      %v402 = vmin.f32 %v386, 20.0
      %v403 = vmin.f32 %v387, 20.0
      %v404 = vmin.f32 %v388, 20.0
      %v405 = vmin.f32 %v389, 20.0
      %v406 = vmin.f32 %v390, 20.0
      %v407 = vmin.f32 %v391, 20.0
      %v408 = vmin.f32 %v392, 20.0
      %v409 = vmin.f32 %v393, 20.0
      %v410 = vmin.f32 %v394, 20.0
      %v411 = vmin.f32 %v395, 20.0
      %v412 = vmul.f32 %v396, 1.442695
      %v413 = vpow.pop %v412
      %v414 = vmul.f32 %v397, 1.442695
      %v415 = vpow.pop %v414
      %v416 = vmul.f32 %v398, 1.442695
      %v417 = vpow.pop %v416
      %v418 = vmul.f32 %v399, 1.442695
      %v419 = vpow.pop %v418
      %v420 = vmul.f32 %v400, 1.442695
      %v421 = vpow.pop %v420
      %v422 = vmul.f32 %v401, 1.442695
      %v423 = vpow.pop %v422
      %v424 = vmul.f32 %v402, 1.442695
      %v425 = vpow.pop %v424
      %v426 = vmul.f32 %v403, 1.442695
      %v427 = vpow.pop %v426
      %v428 = vmul.f32 %v404, 1.442695
      %v429 = vpow.pop %v428
      %v430 = vmul.f32 %v405, 1.442695
      %v431 = vpow.pop %v430
      %v432 = vmul.f32 %v406, 1.442695
      %v433 = vpow.pop %v432
      %v434 = vmul.f32 %v407, 1.442695
      %v435 = vpow.pop %v434
      %v436 = vmul.f32 %v408, 1.442695
      %v437 = vpow.pop %v436
      %v438 = vmul.f32 %v409, 1.442695
      %v439 = vpow.pop %v438
      %v440 = vmul.f32 %v410, 1.442695
      %v441 = vpow.pop %v440
      %v442 = vmul.f32 %v411, 1.442695
      %v443 = vpow.pop %v442
      %v444 = vadd.f32 %v413, 2.0
      %v445 = vadd.f32 %v415, 2.0
      %v446 = vadd.f32 %v417, 2.0
      %v447 = vadd.f32 %v419, 2.0
      %v448 = vadd.f32 %v421, 2.0
      %v449 = vadd.f32 %v423, 2.0
      %v450 = vadd.f32 %v425, 2.0
      %v451 = vadd.f32 %v427, 2.0
      %v452 = vadd.f32 %v429, 2.0
      %v453 = vadd.f32 %v431, 2.0
      %v454 = vadd.f32 %v433, 2.0
      %v455 = vadd.f32 %v435, 2.0
      %v456 = vadd.f32 %v437, 2.0
      %v457 = vadd.f32 %v439, 2.0
      %v458 = vadd.f32 %v441, 2.0
      %v459 = vadd.f32 %v443, 2.0
      %v460 = vmul.f32 %v413, %v444
      %v461 = vmul.f32 %v415, %v445
      %v462 = vmul.f32 %v417, %v446
      %v463 = vmul.f32 %v419, %v447
      %v464 = vmul.f32 %v421, %v448
      %v465 = vmul.f32 %v423, %v449
      %v466 = vmul.f32 %v425, %v450
      %v467 = vmul.f32 %v427, %v451
      %v468 = vmul.f32 %v429, %v452
      %v469 = vmul.f32 %v431, %v453
      %v470 = vmul.f32 %v433, %v454
      %v471 = vmul.f32 %v435, %v455
      %v472 = vmul.f32 %v437, %v456
      %v473 = vmul.f32 %v439, %v457
      %v474 = vmul.f32 %v441, %v458
      %v475 = vmul.f32 %v443, %v459
      %vm476 = vcmp.gt.f32.partialorder %v380, 20.0
      %vm477 = vcmp.gt.f32.partialorder %v381, 20.0
      %vm478 = vcmp.gt.f32.partialorder %v382, 20.0
      %vm479 = vcmp.gt.f32.partialorder %v383, 20.0
      %vm480 = vcmp.gt.f32.partialorder %v384, 20.0
      %vm481 = vcmp.gt.f32.partialorder %v385, 20.0
      %vm482 = vcmp.gt.f32.partialorder %v386, 20.0
      %vm483 = vcmp.gt.f32.partialorder %v387, 20.0
      %vm484 = vcmp.gt.f32.partialorder %v388, 20.0
      %vm485 = vcmp.gt.f32.partialorder %v389, 20.0
      %vm486 = vcmp.gt.f32.partialorder %v390, 20.0
      %vm487 = vcmp.gt.f32.partialorder %v391, 20.0
      %vm488 = vcmp.gt.f32.partialorder %v392, 20.0
      %vm489 = vcmp.gt.f32.partialorder %v393, 20.0
      %vm490 = vcmp.gt.f32.partialorder %v394, 20.0
      %vm491 = vcmp.gt.f32.partialorder %v395, 20.0
      %v492 = vadd.f32 %v460, 2.0
      %v493 = vadd.f32 %v461, 2.0
      %v494 = vadd.f32 %v462, 2.0
      %v495 = vadd.f32 %v463, 2.0
      %v496 = vadd.f32 %v464, 2.0
      %v497 = vadd.f32 %v465, 2.0
      %v498 = vadd.f32 %v466, 2.0
      %v499 = vadd.f32 %v467, 2.0
      %v500 = vadd.f32 %v468, 2.0
      %v501 = vadd.f32 %v469, 2.0
      %v502 = vadd.f32 %v470, 2.0
      %v503 = vadd.f32 %v471, 2.0
      %v504 = vadd.f32 %v472, 2.0
      %v505 = vadd.f32 %v473, 2.0
      %v506 = vadd.f32 %v474, 2.0
      %v507 = vadd.f32 %v475, 2.0
      %v508 = vrcp.pop %v492
      %v509 = vmul.f32 %v460, %v508
      %v510 = vrcp.pop %v493
      %v511 = vmul.f32 %v461, %v510
      %v512 = vrcp.pop %v494
      %v513 = vmul.f32 %v462, %v512
      %v514 = vrcp.pop %v495
      %v515 = vmul.f32 %v463, %v514
      %v516 = vrcp.pop %v496
      %v517 = vmul.f32 %v464, %v516
      %v518 = vrcp.pop %v497
      %v519 = vmul.f32 %v465, %v518
      %v520 = vrcp.pop %v498
      %v521 = vmul.f32 %v466, %v520
      %v522 = vrcp.pop %v499
      %v523 = vmul.f32 %v467, %v522
      %v524 = vrcp.pop %v500
      %v525 = vmul.f32 %v468, %v524
      %v526 = vrcp.pop %v501
      %v527 = vmul.f32 %v469, %v526
      %v528 = vrcp.pop %v502
      %v529 = vmul.f32 %v470, %v528
      %v530 = vrcp.pop %v503
      %v531 = vmul.f32 %v471, %v530
      %v532 = vrcp.pop %v504
      %v533 = vmul.f32 %v472, %v532
      %v534 = vrcp.pop %v505
      %v535 = vmul.f32 %v473, %v534
      %v536 = vrcp.pop %v506
      %v537 = vmul.f32 %v474, %v536
      %v538 = vrcp.pop %v507
      %v539 = vmul.f32 %v475, %v538
      %v540 = vmul.f32 %v380, %v509
      %v541 = vmul.f32 %v381, %v511
      %v542 = vmul.f32 %v382, %v513
      %v543 = vmul.f32 %v383, %v515
      %v544 = vmul.f32 %v384, %v517
      %v545 = vmul.f32 %v385, %v519
      %v546 = vmul.f32 %v386, %v521
      %v547 = vmul.f32 %v387, %v523
      %v548 = vmul.f32 %v388, %v525
      %v549 = vmul.f32 %v389, %v527
      %v550 = vmul.f32 %v390, %v529
      %v551 = vmul.f32 %v391, %v531
      %v552 = vmul.f32 %v392, %v533
      %v553 = vmul.f32 %v393, %v535
      %v554 = vmul.f32 %v394, %v537
      %v555 = vmul.f32 %v395, %v539
      %v556 = vsel %vm476, %v380, %v540
      %v557 = vsel %vm477, %v381, %v541
      %v558 = vsel %vm478, %v382, %v542
      %v559 = vsel %vm479, %v383, %v543
      %v560 = vsel %vm480, %v384, %v544
      %v561 = vsel %vm481, %v385, %v545
      %v562 = vsel %vm482, %v386, %v546
      %v563 = vsel %vm483, %v387, %v547
      %v564 = vsel %vm484, %v388, %v548
      %v565 = vsel %vm485, %v389, %v549
      %v566 = vsel %vm486, %v390, %v550
      %v567 = vsel %vm487, %v391, %v551
      %v568 = vsel %vm488, %v392, %v552
      %v569 = vsel %vm489, %v393, %v553
      %v570 = vsel %vm490, %v394, %v554
      %v571 = vsel %vm491, %v395, %v555
      %v572 = vld [vmem:[%s256] sm:$0xff]
      %v573 = vld [vmem:[%s256 + $0x8] sm:$0xff]
      %v574 = vld [vmem:[%s256 + $0x10] sm:$0xff]
      %v575 = vld [vmem:[%s256 + $0x18] sm:$0xff]
      %v576 = vld [vmem:[%s256 + $0x20] sm:$0xff]
      %v577 = vld [vmem:[%s256 + $0x28] sm:$0xff]
      %v578 = vld [vmem:[%s256 + $0x30] sm:$0xff]
      %v579 = vld [vmem:[%s256 + $0x38] sm:$0xff]
      %v580 = vld [vmem:[%s256 + $0x40] sm:$0xff]
      %v581 = vld [vmem:[%s256 + $0x48] sm:$0xff]
      %v582 = vld [vmem:[%s256 + $0x50] sm:$0xff]
      %v583 = vld [vmem:[%s256 + $0x58] sm:$0xff]
      %v584 = vld [vmem:[%s256 + $0x60] sm:$0xff]
      %v585 = vld [vmem:[%s256 + $0x68] sm:$0xff]
      %v586 = vld [vmem:[%s256 + $0x70] sm:$0xff]
      %v587 = vld [vmem:[%s256 + $0x78] sm:$0xff]
      %v588 = vadd.f32 %v556, %v572
      %v589 = vadd.f32 %v557, %v573
      %v590 = vadd.f32 %v558, %v574
      %v591 = vadd.f32 %v559, %v575
      %v592 = vadd.f32 %v560, %v576
      %v593 = vadd.f32 %v561, %v577
      %v594 = vadd.f32 %v562, %v578
      %v595 = vadd.f32 %v563, %v579
      %v596 = vadd.f32 %v564, %v580
      %v597 = vadd.f32 %v565, %v581
      %v598 = vadd.f32 %v566, %v582
      %v599 = vadd.f32 %v567, %v583
      %v600 = vadd.f32 %v568, %v584
      %v601 = vadd.f32 %v569, %v585
      %v602 = vadd.f32 %v570, %v586
      %v603 = vadd.f32 %v571, %v587
      %vm604 = vcmask 39936
      %605 = vst.msk [vmem:[%s266] sm:$0xff] %vm604, %v588
      %606 = vst.msk [vmem:[%s266 + $0x8] sm:$0xff] %vm604, %v589
      %607 = vst.msk [vmem:[%s266 + $0x10] sm:$0xff] %vm604, %v590
      %608 = vst.msk [vmem:[%s266 + $0x18] sm:$0xff] %vm604, %v591
      %609 = vst.msk [vmem:[%s266 + $0x20] sm:$0xff] %vm604, %v592
      %610 = vst.msk [vmem:[%s266 + $0x28] sm:$0xff] %vm604, %v593
      %611 = vst.msk [vmem:[%s266 + $0x30] sm:$0xff] %vm604, %v594
      %612 = vst.msk [vmem:[%s266 + $0x38] sm:$0xff] %vm604, %v595
      %613 = vst.msk [vmem:[%s266 + $0x40] sm:$0xff] %vm604, %v596
      %614 = vst.msk [vmem:[%s266 + $0x48] sm:$0xff] %vm604, %v597
      %615 = vst.msk [vmem:[%s266 + $0x50] sm:$0xff] %vm604, %v598
      %616 = vst.msk [vmem:[%s266 + $0x58] sm:$0xff] %vm604, %v599
      %617 = vst.msk [vmem:[%s266 + $0x60] sm:$0xff] %vm604, %v600
      %618 = vst.msk [vmem:[%s266 + $0x68] sm:$0xff] %vm604, %v601
      %619 = vst.msk [vmem:[%s266 + $0x70] sm:$0xff] %vm604, %v602
      %620 = vst.msk [vmem:[%s266 + $0x78] sm:$0xff] %vm604, %v603
      %s621 = smul.u32 16, %s19
      %p622 = scmp.lt.s32.totalorder %s18, 1
      %s623 = scalar_select %p622, %s18, 1
      %p624 = scmp.lt.s32.totalorder %s621, 15
      %s625 = scalar_select %p624, %s621, 15
      %s626 = smul.addr %s623, 16
      %s627 = sadd.s32 %s625, %s626
      %s628 = smul.addr %s627, 8
      %s629 = scalar_lea.vmem %s3, %s628
      // Predicated region
      $region33: #{base_model_forward.8} parent=31 // pred_check
        %p630 = pneg %p128
      $region34: #{base_model_forward.8} parent=31 // pred_check_branch
        %632 = sbr.rel (%p630) target = $region36
      $region35: #{base_model_forward.8} parent=31 // pred_region
        %s633 = smul.u32 16, %s19
      $region36: #{base_model_forward.8} parent=31 // pred_fallthru
        _
    $region32: #{base_model_forward.8} parent=5 // pred_fallthru
      _
    %p634 = scmp.le.s32.totalorder 2, %s9
    // Predicated region
    $region37: #{base_model_forward.8} parent=5 // pred_check
      %p635 = pneg %p634
    $region38: #{base_model_forward.8} parent=5 // pred_check_branch
      %637 = sbr.rel (%p635) target = $region40
    $region39: #{base_model_forward.8} parent=5 // pred_region
      %s638 = ssub.s32 %s9, 2
      // Predicated region
      $region41: #{base_model_forward.8} parent=39 // pred_check
        %p639 = pneg %p134
      $region42: #{base_model_forward.8} parent=39 // pred_check_branch
        %641 = sbr.rel (%p639) target = $region44
      $region43: #{base_model_forward.8} parent=39 // pred_region
        %s642 = smul.u32 16, %s21
        %p643 = scmp.lt.s32.totalorder %s20, 1
        %s644 = scalar_select %p643, %s20, 1
        %p645 = scmp.lt.s32.totalorder %s642, 15
        %s646 = scalar_select %p645, %s642, 15
        %s647 = smul.addr %s644, 16
        %s648 = sadd.s32 %s646, %s647
        %s649 = smul.addr %s648, 8
        %s650 = scalar_lea.vmem %s3, %s649
      $region44: #{base_model_forward.8} parent=39 // pred_fallthru
        _
    $region40: #{base_model_forward.8} parent=5 // pred_fallthru
      _
  $region6: #{base_model_forward.8} parent=0 // loop_footer
    %s13 = sadd.s32 1, %s9
  $region7: #{base_model_forward.8} parent=0 // loop_footer_branch
    %8 = sbr.rel target = $region3
  $region8: #{base_model_forward.8} parent=0 // loop_exit
    _

// kernel: base_model_forward.9
$region0: #{base_model_forward.9}
  #allocation0 [shape = 'u32[]', space=smem, size = 0x4, offset = 0x4, fixed_abs, tag = 'smem constant byte address 0x4 - core index']
  #allocation1 [shape = 'u32[144,128]{1,0:T(1,128)}', space=vmem, size = 0x12000, scoped, tag = 'internal scratch']
  %s0 = inlined_call_operand.vmem [shape: f32[2,32,5], index: 0, kind: input, shape index: {}]
  %s1 = inlined_call_operand.vmem [shape: f32[32,1], index: 1, kind: input, shape index: {}]
  %s2 = inlined_call_operand.vmem [shape: f32[2,32,5], index: 2, kind: output, shape index: {}]
  %s3 = sld [smem:[#allocation0]]
  $region41: #{base_model_forward.9} parent=0
    _
  %s5 = ssub.s32 1, %s3
  %s6 = scalar_select 0, %s5, %s3
  loop: start=0, step=1, limit=4
  $region2: #{base_model_forward.9} parent=0 // loop_pre_header
    _
  $region3: #{base_model_forward.9} parent=0 // loop_header
    %s8 = sphi 0, %s12
    %p9 = scmp.ge.s32.totalorder %s8, 4
    %s15 = sphi 0, %s27
    %s16 = sphi 0, %s23
    %s17 = sphi 0, %s15
    %s18 = sphi 0, %s16
    %s19 = sphi 0, %s17
    %s20 = sphi 0, %s18
    %s32 = sphi 0, %s34
    %s35 = sphi 0, %s32
    %s36 = sphi 0, %s35
    %s52 = sphi 0, %s36
    %s58 = sphi 0, %s60
    %s61 = sphi 0, %s58
    %s62 = sphi 0, %s61
    %s78 = sphi 0, %s62
    %s86 = sphi 0, %s88
    %s89 = sphi 0, %s86
    %s90 = sphi 0, %s89
    %s106 = sphi 0, %s90
  $region4: #{base_model_forward.9} parent=0 // loop_header_branch
    %11 = sbr.rel (%p9) target = $region8
  $region5: #{base_model_forward.9} parent=0 // loop_body
    %s13 = ssub.s32 %s8, 1
    %s14 = ssub.s32 %s8, 2
    %s21 = sadd.s32 1, %s16
    %p22 = scmp.ge.s32.totalorder %s21, 1
    %s23 = scalar_select %p22, 0, %s21
    %s24 = sadd.s32 1, %s15
    %s25 = scalar_select %p22, %s24, %s15
    %p26 = scmp.ge.s32.totalorder %s25, 2
    %s27 = scalar_select %p26, 0, %s25
    %s28 = ssub.s32 %s15, %s27
    %s29 = ssub.s32 %s16, %s23
    %s30 = sor.u32 %s28, %s29
    %p31 = scmp.eq.s32.totalorder %s30, 0
    %s33 = sadd.s32 %s32, 1
    %s34 = scalar_select %p31, %s32, %s33
    %p37 = pneg %p31
    %p38 = scmp.eq.s32.totalorder %s8, 1
    %p39 = por %p37, %p38
    %p40 = scmp.ne.s32.totalorder %s32, %s35
    %p41 = scmp.eq.s32.totalorder %s8, 0
    %p42 = por %p40, %p41
    %p43 = scmp.ne.s32.totalorder %s32, %s35
    %p44 = scmp.eq.s32.totalorder %s13, 1
    %p45 = por %p43, %p44
    %p46 = scmp.ne.s32.totalorder %s35, %s36
    %p47 = scmp.eq.s32.totalorder %s13, 0
    %p48 = por %p46, %p47
    %p49 = scmp.ne.s32.totalorder %s35, %s36
    %p50 = scmp.eq.s32.totalorder %s14, 1
    %p51 = por %p49, %p50
    %p53 = scmp.ne.s32.totalorder %s36, %s52
    %p54 = scmp.eq.s32.totalorder %s14, 0
    %p55 = por %p53, %p54
    %s56 = ssub.s32 %s16, %s23
    %p57 = scmp.eq.s32.totalorder %s56, 0
    %s59 = sadd.s32 %s58, 1
    %s60 = scalar_select %p57, %s58, %s59
    %p63 = pneg %p57
    %p64 = scmp.eq.s32.totalorder %s8, 1
    %p65 = por %p63, %p64
    %p66 = scmp.ne.s32.totalorder %s58, %s61
    %p67 = scmp.eq.s32.totalorder %s8, 0
    %p68 = por %p66, %p67
    %p69 = scmp.ne.s32.totalorder %s58, %s61
    %p70 = scmp.eq.s32.totalorder %s13, 1
    %p71 = por %p69, %p70
    %p72 = scmp.ne.s32.totalorder %s61, %s62
    %p73 = scmp.eq.s32.totalorder %s13, 0
    %p74 = por %p72, %p73
    %p75 = scmp.ne.s32.totalorder %s61, %s62
    %p76 = scmp.eq.s32.totalorder %s14, 1
    %p77 = por %p75, %p76
    %p79 = scmp.ne.s32.totalorder %s62, %s78
    %p80 = scmp.eq.s32.totalorder %s14, 0
    %p81 = por %p79, %p80
    %s82 = ssub.s32 %s15, %s27
    %s83 = ssub.s32 %s16, %s23
    %s84 = sor.u32 %s82, %s83
    %p85 = scmp.eq.s32.totalorder %s84, 0
    %s87 = sadd.s32 %s86, 1
    %s88 = scalar_select %p85, %s86, %s87
    %p91 = pneg %p85
    %p92 = scmp.eq.s32.totalorder %s8, 1
    %p93 = por %p91, %p92
    %p94 = scmp.ne.s32.totalorder %s86, %s89
    %p95 = scmp.eq.s32.totalorder %s8, 0
    %p96 = por %p94, %p95
    %p97 = scmp.ne.s32.totalorder %s86, %s89
    %p98 = scmp.eq.s32.totalorder %s13, 1
    %p99 = por %p97, %p98
    %p100 = scmp.ne.s32.totalorder %s89, %s90
    %p101 = scmp.eq.s32.totalorder %s13, 0
    %p102 = por %p100, %p101
    %p103 = scmp.ne.s32.totalorder %s89, %s90
    %p104 = scmp.eq.s32.totalorder %s14, 1
    %p105 = por %p103, %p104
    %p107 = scmp.ne.s32.totalorder %s90, %s106
    %p108 = scmp.eq.s32.totalorder %s14, 0
    %p109 = por %p107, %p108
    %p110 = scmp.le.s32.totalorder 1, %s8
    %p111 = scmp.lt.s32.totalorder %s8, 3
    %p112 = pnand %p110, %p111
    %p113 = pneg %p112
    // Predicated region
    $region9: #{base_model_forward.9} parent=5 // pred_check
      _
    $region10: #{base_model_forward.9} parent=5 // pred_check_branch
      %115 = sbr.rel (%p112) target = $region12
    $region11: #{base_model_forward.9} parent=5 // pred_region
      %s116 = ssub.s32 %s8, 1
      // Predicated region
      $region13: #{base_model_forward.9} parent=11 // pred_check
        %p117 = pneg %p74
      $region14: #{base_model_forward.9} parent=11 // pred_check_branch
        %119 = sbr.rel (%p117) target = $region16
      $region15: #{base_model_forward.9} parent=11 // pred_region
        %s120 = smul.u32 4, %s18
        %p121 = scmp.lt.s32.totalorder %s120, 3
        %s122 = scalar_select %p121, %s120, 3
        %s123 = smul.addr %s122, 8
        %s124 = scalar_lea.vmem %s1, %s123
        %s125 = smul.u32 4, %s18
      $region16: #{base_model_forward.9} parent=11 // pred_fallthru
        _
    $region12: #{base_model_forward.9} parent=5 // pred_fallthru
      _
    %p126 = scmp.lt.s32.totalorder %s8, 2
    // Predicated region
    $region17: #{base_model_forward.9} parent=5 // pred_check
      %p127 = pneg %p126
    $region18: #{base_model_forward.9} parent=5 // pred_check_branch
      %129 = sbr.rel (%p127) target = $region20
    $region19: #{base_model_forward.9} parent=5 // pred_region
      // Predicated region
      $region21: #{base_model_forward.9} parent=19 // pred_check
        %p130 = pneg %p42
      $region22: #{base_model_forward.9} parent=19 // pred_check_branch
        %132 = sbr.rel (%p130) target = $region24
      $region23: #{base_model_forward.9} parent=19 // pred_region
        %s133 = smul.u32 4, %s16
        %p134 = scmp.lt.s32.totalorder %s15, 1
        %s135 = scalar_select %p134, %s15, 1
        %p136 = scmp.lt.s32.totalorder %s133, 3
        %s137 = scalar_select %p136, %s133, 3
        %s138 = smul.addr %s135, 4
        %s139 = sadd.s32 %s137, %s138
        %s140 = smul.addr %s139, 8
        %s141 = scalar_lea.vmem %s0, %s140
        %s142 = smul.u32 4, %s16
      $region24: #{base_model_forward.9} parent=19 // pred_fallthru
        _
    $region20: #{base_model_forward.9} parent=5 // pred_fallthru
      _
    %p143 = scmp.le.s32.totalorder 1, %s8
    %p144 = scmp.lt.s32.totalorder %s8, 3
    %p145 = pnand %p143, %p144
    %p146 = pneg %p145
    // Predicated region
    $region25: #{base_model_forward.9} parent=5 // pred_check
      _
    $region26: #{base_model_forward.9} parent=5 // pred_check_branch
      %148 = sbr.rel (%p145) target = $region28
    $region27: #{base_model_forward.9} parent=5 // pred_region
      %s149 = ssub.s32 %s8, 1
      %s150 = smul.u32 4, %s18
      %p151 = scmp.lt.s32.totalorder %s17, 1
      %s152 = scalar_select %p151, %s17, 1
      %p153 = scmp.lt.s32.totalorder %s150, 3
      %s154 = scalar_select %p153, %s150, 3
      %s155 = smul.addr %s152, 4
      %s156 = sadd.s32 %s154, %s155
      %s157 = smul.addr %s156, 8
      %s158 = scalar_lea.vmem %s0, %s157
      %p159 = pneg %p48
      %p160 = pneg %p45
      %s161 = smul.u32 4, %s18
      %p162 = scmp.lt.s32.totalorder %s161, 3
      %s163 = scalar_select %p162, %s161, 3
      %s164 = smul.addr %s163, 8
      %s165 = scalar_lea.vmem %s1, %s164
      %p166 = pneg %p74
      %p167 = pneg %p71
      %p168 = pneg %p102
      %p169 = pneg %p99
      %s170 = smul.u32 4, %s18
      %p171 = scmp.lt.s32.totalorder %s17, 1
      %s172 = scalar_select %p171, %s17, 1
      %p173 = scmp.lt.s32.totalorder %s170, 3
      %s174 = scalar_select %p173, %s170, 3
      %s175 = smul.addr %s172, 4
      %s176 = sadd.s32 %s174, %s175
      %s177 = smul.addr %s176, 8
      %s178 = scalar_lea.vmem %s2, %s177
      %s179 = smul.u32 4, %s18
      %p180 = scmp.lt.s32.totalorder %s17, 1
      %s181 = scalar_select %p180, %s17, 1
      %p182 = scmp.lt.s32.totalorder %s179, 3
      %s183 = scalar_select %p182, %s179, 3
      %s184 = smul.addr %s181, 4
      %s185 = sadd.s32 %s183, %s184
      %s186 = smul.addr %s185, 8
      %s187 = scalar_lea.vmem %s0, %s186
      %s188 = smul.u32 4, %s18
      %s189 = smul.u32 4, %s18
      %p190 = scmp.lt.s32.totalorder %s189, 3
      %s191 = scalar_select %p190, %s189, 3
      %s192 = smul.addr %s191, 8
      %s193 = scalar_lea.vmem %s1, %s192
      %s194 = smul.u32 4, %s18
      %s195 = smul.u32 4, %s18
      %p196 = scmp.lt.s32.totalorder %s17, 1
      %s197 = scalar_select %p196, %s17, 1
      %p198 = scmp.lt.s32.totalorder %s195, 3
      %s199 = scalar_select %p198, %s195, 3
      %s200 = smul.addr %s197, 4
      %s201 = sadd.s32 %s199, %s200
      %s202 = smul.addr %s201, 8
      %s203 = scalar_lea.vmem %s2, %s202
      %s204 = smul.u32 4, %s18
      %v205 = vld [vmem:[%s187] sm:$0xff]
      %v206 = vld [vmem:[%s187 + $0x8] sm:$0xff]
      %v207 = vld [vmem:[%s187 + $0x10] sm:$0xff]
      %v208 = vld [vmem:[%s187 + $0x18] sm:$0xff]
      %v209 = vld [vmem:[%s193] sm:$0xff]
      %v210 = vld [vmem:[%s193 + $0x8] sm:$0xff]
      %v211 = vld [vmem:[%s193 + $0x10] sm:$0xff]
      %v212 = vld [vmem:[%s193 + $0x18] sm:$0xff]
      %214 = vset.pattern.permute.xlu0 0
      %215 = vperm.xlu0 %214, %v209
      %v216 = vpop.permute.xlu0 %215
      %219 = vset.pattern.permute.xlu0 0
      %220 = vperm.xlu0 %219, %v210
      %v221 = vpop.permute.xlu0 %220
      %224 = vset.pattern.permute.xlu0 0
      %225 = vperm.xlu0 %224, %v211
      %v226 = vpop.permute.xlu0 %225
      %229 = vset.pattern.permute.xlu0 0
      %230 = vperm.xlu0 %229, %v212
      %v231 = vpop.permute.xlu0 %230
      %v233 = vadd.f32 %v205, %v216
      %v234 = vadd.f32 %v206, %v221
      %v235 = vadd.f32 %v207, %v226
      %v236 = vadd.f32 %v208, %v231
      %v237 = vmin.f32 %v233, 20.0
      %v238 = vmin.f32 %v234, 20.0
      %v239 = vmin.f32 %v235, 20.0
      %v240 = vmin.f32 %v236, 20.0
      %v241 = vmul.f32 %v237, 1.442695
      %v242 = vpow.pop %v241
      %v243 = vmul.f32 %v238, 1.442695
      %v244 = vpow.pop %v243
      %v245 = vmul.f32 %v239, 1.442695
      %v246 = vpow.pop %v245
      %v247 = vmul.f32 %v240, 1.442695
      %v248 = vpow.pop %v247
      %v249 = vadd.f32 %v242, 2.0
      %v250 = vadd.f32 %v244, 2.0
      %v251 = vadd.f32 %v246, 2.0
      %v252 = vadd.f32 %v248, 2.0
      %v253 = vmul.f32 %v242, %v249
      %v254 = vmul.f32 %v244, %v250
      %v255 = vmul.f32 %v246, %v251
      %v256 = vmul.f32 %v248, %v252
      %vm257 = vcmp.gt.f32.partialorder %v233, 20.0
      %vm258 = vcmp.gt.f32.partialorder %v234, 20.0
      %vm259 = vcmp.gt.f32.partialorder %v235, 20.0
      %vm260 = vcmp.gt.f32.partialorder %v236, 20.0
      %v261 = vadd.f32 %v253, 2.0
      %v262 = vadd.f32 %v254, 2.0
      %v263 = vadd.f32 %v255, 2.0
      %v264 = vadd.f32 %v256, 2.0
      %v265 = vrcp.pop %v261
      %v266 = vmul.f32 %v253, %v265
      %v267 = vrcp.pop %v262
      %v268 = vmul.f32 %v254, %v267
      %v269 = vrcp.pop %v263
      %v270 = vmul.f32 %v255, %v269
      %v271 = vrcp.pop %v264
      %v272 = vmul.f32 %v256, %v271
      %v273 = vmul.f32 %v233, %v266
      %v274 = vmul.f32 %v234, %v268
      %v275 = vmul.f32 %v235, %v270
      %v276 = vmul.f32 %v236, %v272
      %v277 = vsel %vm257, %v233, %v273
      %v278 = vsel %vm258, %v234, %v274
      %v279 = vsel %vm259, %v235, %v275
      %v280 = vsel %vm260, %v236, %v276
      %vm281 = vcmask 39936
      %282 = vst.msk [vmem:[%s203] sm:$0xff] %vm281, %v277
      %283 = vst.msk [vmem:[%s203 + $0x8] sm:$0xff] %vm281, %v278
      %284 = vst.msk [vmem:[%s203 + $0x10] sm:$0xff] %vm281, %v279
      %285 = vst.msk [vmem:[%s203 + $0x18] sm:$0xff] %vm281, %v280
      %s286 = smul.u32 4, %s18
      %p287 = scmp.lt.s32.totalorder %s17, 1
      %s288 = scalar_select %p287, %s17, 1
      %p289 = scmp.lt.s32.totalorder %s286, 3
      %s290 = scalar_select %p289, %s286, 3
      %s291 = smul.addr %s288, 4
      %s292 = sadd.s32 %s290, %s291
      %s293 = smul.addr %s292, 8
      %s294 = scalar_lea.vmem %s2, %s293
      // Predicated region
      $region29: #{base_model_forward.9} parent=27 // pred_check
        %p295 = pneg %p99
      $region30: #{base_model_forward.9} parent=27 // pred_check_branch
        %297 = sbr.rel (%p295) target = $region32
      $region31: #{base_model_forward.9} parent=27 // pred_region
        %s298 = smul.u32 4, %s18
      $region32: #{base_model_forward.9} parent=27 // pred_fallthru
        _
    $region28: #{base_model_forward.9} parent=5 // pred_fallthru
      _
    %p299 = scmp.le.s32.totalorder 2, %s8
    // Predicated region
    $region33: #{base_model_forward.9} parent=5 // pred_check
      %p300 = pneg %p299
    $region34: #{base_model_forward.9} parent=5 // pred_check_branch
      %302 = sbr.rel (%p300) target = $region36
    $region35: #{base_model_forward.9} parent=5 // pred_region
      %s303 = ssub.s32 %s8, 2
      // Predicated region
      $region37: #{base_model_forward.9} parent=35 // pred_check
        %p304 = pneg %p105
      $region38: #{base_model_forward.9} parent=35 // pred_check_branch
        %306 = sbr.rel (%p304) target = $region40
      $region39: #{base_model_forward.9} parent=35 // pred_region
        %s307 = smul.u32 4, %s20
        %p308 = scmp.lt.s32.totalorder %s19, 1
        %s309 = scalar_select %p308, %s19, 1
        %p310 = scmp.lt.s32.totalorder %s307, 3
        %s311 = scalar_select %p310, %s307, 3
        %s312 = smul.addr %s309, 4
        %s313 = sadd.s32 %s311, %s312
        %s314 = smul.addr %s313, 8
        %s315 = scalar_lea.vmem %s2, %s314
      $region40: #{base_model_forward.9} parent=35 // pred_fallthru
        _
    $region36: #{base_model_forward.9} parent=5 // pred_fallthru
      _
  $region6: #{base_model_forward.9} parent=0 // loop_footer
    %s12 = sadd.s32 1, %s8
  $region7: #{base_model_forward.9} parent=0 // loop_footer_branch
    %7 = sbr.rel target = $region3
  $region8: #{base_model_forward.9} parent=0 // loop_exit
    _

</llo_original>
